<compile_context>
chip_gen: v7x
topology: tpu7x:2x2x1
jax: 0.10.0
libtpu: 0.0.40
codegen_flags: <defaults>
</compile_context>

<pallas_src>
import functools

import jax
import jax.numpy as jnp
from jax.experimental import pallas as pl
from jax.experimental.pallas import tpu as pltpu


def _round_up(x, m):
    return ((x + m - 1) // m) * m


def lstm_kernel(x_ref, wih_ref, whh_ref, wd_ref, bd_ref, out_ref,
                gates_ref, h_ref, c_ref, *,
                seq_len, chunk, bb, hidden_p, num_classes, mask_tail):
    """One grid step = one (batch-block, time-chunk) tile.

    x_ref    : (chunk*bb, Ep)  bf16  embedded tokens for this chunk, rows
                                     [t*bb:(t+1)*bb] = batch-block rows of step t.
                                     Column E holds 1.0 (bias-fold column).
    wih_ref  : (Ep, 4Hp)       bf16  input->gate weights, row E holds b_ih + b_hh.
    whh_ref  : (Hp, 4Hp)       bf16  hidden->gate weights.
    wd_ref   : (Hp, Cp)        bf16  dense weights.
    bd_ref   : (1, Cp)         f32   dense bias.
    out_ref  : (bb, Cp)        f32   softmax output (written on last chunk only).
    gates_ref: (chunk*bb, 4Hp) f32   scratch: per-chunk input-projection pre-acts.
    h_ref,c_ref: (bb, Hp)      f32   scratch: recurrent carries across chunks.
    """
    Hp = hidden_p
    chunk_idx = pl.program_id(1)
    n_chunks = pl.num_programs(1)

    # ---- init carries at the first chunk of every batch block ----
    @pl.when(chunk_idx == 0)
    def _():
        h_ref[...] = jnp.zeros_like(h_ref)
        c_ref[...] = jnp.zeros_like(c_ref)

    # ---- Phase 1 (per chunk): hoisted input projection + bias for `chunk` steps
    #      in a single MXU matmul. Bias is folded via the ones-column of x. ----
    gates_ref[...] = jnp.dot(x_ref[...], wih_ref[...],
                             preferred_element_type=jnp.float32)

    # ---- Phase 2: sequential recurrence; only h @ W_hh on the critical path ----
    whh = whh_ref[...]
    t_base = chunk_idx * chunk

    def step(t, carry):
        h, c = carry
        row = pl.multiple_of(t * bb, bb)
        g = gates_ref[pl.ds(row, bb), :] + jnp.dot(
            h.astype(whh.dtype), whh, preferred_element_type=jnp.float32)
        # PyTorch nn.LSTM gate order: input, forget, cell(g), output.
        # Gate slices are lane-aligned (each gate block padded to Hp, mult. of 128).
        i_g = jax.nn.sigmoid(g[:, 0 * Hp:1 * Hp])
        f_g = jax.nn.sigmoid(g[:, 1 * Hp:2 * Hp])
        g_g = jnp.tanh(g[:, 2 * Hp:3 * Hp])
        o_g = jax.nn.sigmoid(g[:, 3 * Hp:4 * Hp])
        c_new = f_g * c + i_g * g_g
        h_new = o_g * jnp.tanh(c_new)
        if mask_tail:
            valid = (t_base + t) < seq_len          # skip zero-padded tail steps
            h_new = jnp.where(valid, h_new, h)
            c_new = jnp.where(valid, c_new, c)
        return h_new, c_new

    h_t, c_t = jax.lax.fori_loop(0, chunk, step, (h_ref[...], c_ref[...]),
                                 unroll=min(chunk, 8))
    h_ref[...] = h_t
    c_ref[...] = c_t

    # ---- Phase 3: classifier head on the last chunk (dropout = identity in eval) ----
    @pl.when(chunk_idx == n_chunks - 1)
    def _():
        logits = jnp.dot(h_t.astype(wd_ref.dtype), wd_ref[...],
                         preferred_element_type=jnp.float32) + bd_ref[...]
        col = jax.lax.broadcasted_iota(jnp.int32, logits.shape, 1)
        logits = jnp.where(col < num_classes, logits, jnp.float32(-1e30))
        m = jnp.max(logits, axis=1, keepdims=True)
        e = jnp.exp(logits - m)
        # Exact divide: rows must sum to 1 to f32 precision.
        out_ref[...] = (e / jnp.sum(e, axis=1, keepdims=True)).astype(out_ref.dtype)


def lstm_forward(tokens, params, *, chunk_steps=32):
    """tokens: (B, T) int32 token ids. Returns softmax probs (B, num_classes)."""
    emb_table = params["embedding"]        # (V, E)
    w_ih = params["w_ih"]                  # (4H, E)  PyTorch layout
    w_hh = params["w_hh"]                  # (4H, H)
    b_sum = params["b_ih"] + params["b_hh"]
    w_dense = params["w_dense"]            # (C, H)
    b_dense = params["b_dense"]            # (C,)

    B, T = tokens.shape
    E = emb_table.shape[1]
    H = w_hh.shape[1]
    C = w_dense.shape[0]

    # Padded / blocked sizes. Ep reserves one extra column for the bias fold.
    BB = min(_round_up(B, 8), 128)                 # batch-block rows per grid step
    Bp = _round_up(_round_up(B, 8), BB)
    NB = Bp // BB
    Ep = _round_up(E + 1, 128)
    Hp = _round_up(H, 128)
    Cp = _round_up(C, 128)

    CHUNK = min(T, chunk_steps)
    NC = pl.cdiv(T, CHUNK)
    Tp = NC * CHUNK
    mask_tail = (Tp != T)

    # Embedding lookup (gather) is glue; done in plain JAX, directly time-major.
    x = jnp.take(emb_table, tokens.T, axis=0)                # (T, B, E)
    x = jnp.pad(x, ((0, Tp - T), (0, Bp - B), (0, Ep - E)))  # (Tp, Bp, Ep)
    x = x.at[:, :, E].set(1.0)                               # bias-fold column
    # -> (NB, NC, CHUNK*BB, Ep): one lane-aligned slab per grid step.
    x = x.reshape(NC, CHUNK, NB, BB, Ep)
    x = jnp.transpose(x, (2, 0, 1, 3, 4)).reshape(NB, NC, CHUNK * BB, Ep)
    x = x.astype(jnp.bfloat16)

    def pack_gates(w_t, rows, rows_p, bias=None):
        # w_t: (rows, 4H) -> (rows_p, 4Hp); each PyTorch gate block (i,f,g,o) padded
        # H -> Hp. Optional bias goes into row `rows` (matched by x's ones-column).
        out = jnp.zeros((rows_p, 4 * Hp), jnp.float32)
        for g in range(4):
            out = out.at[:rows, g * Hp:g * Hp + H].set(w_t[:, g * H:(g + 1) * H])
            if bias is not None:
                out = out.at[rows, g * Hp:g * Hp + H].set(bias[g * H:(g + 1) * H])
        return out

    wih_p = pack_gates(w_ih.T, E, Ep, bias=b_sum).astype(jnp.bfloat16)  # (Ep, 4Hp)
    whh_p = pack_gates(w_hh.T, H, Hp).astype(jnp.bfloat16)              # (Hp, 4Hp)
    wd_p = jnp.zeros((Hp, Cp), jnp.float32).at[:H, :C].set(w_dense.T).astype(jnp.bfloat16)
    bd_p = jnp.zeros((1, Cp), jnp.float32).at[0, :C].set(b_dense)

    kernel = functools.partial(
        lstm_kernel, seq_len=T, chunk=CHUNK, bb=BB, hidden_p=Hp,
        num_classes=C, mask_tail=mask_tail)

    # Explicitly sized scoped-VMEM budget (double-buffered x chunk + weights +
    # gate scratch + carries + output), with headroom; capped at v7x physical VMEM.
    bf16, f32 = 2, 4
    est = (2 * CHUNK * BB * Ep * bf16                                   # x chunk (x2 buf)
           + 2 * (Ep * 4 * Hp + Hp * 4 * Hp + Hp * Cp) * bf16           # weights (x2 buf)
           + 2 * 8 * Cp * f32                                           # dense bias block
           + 2 * BB * Cp * f32                                          # output block
           + CHUNK * BB * 4 * Hp * f32                                  # gate pre-acts
           + 2 * BB * Hp * f32)                                         # h/c carries
    vmem_limit = int(min(max(2 * est, 16 << 20), 64 << 20))

    out_p = pl.pallas_call(
        kernel,
        out_shape=jax.ShapeDtypeStruct((Bp, Cp), jnp.float32),
        grid=(NB, NC),
        in_specs=[
            # Streamed: only one time-chunk of x is resident (double-buffered DMA).
            pl.BlockSpec((None, None, CHUNK * BB, Ep), lambda b, c: (b, c, 0, 0)),
            # Weights: constant block index -> loaded once, stay resident.
            pl.BlockSpec((Ep, 4 * Hp), lambda b, c: (0, 0)),
            pl.BlockSpec((Hp, 4 * Hp), lambda b, c: (0, 0)),
            pl.BlockSpec((Hp, Cp), lambda b, c: (0, 0)),
            pl.BlockSpec((1, Cp), lambda b, c: (0, 0)),
        ],
        out_specs=pl.BlockSpec((BB, Cp), lambda b, c: (b, 0)),
        scratch_shapes=[
            pltpu.VMEM((CHUNK * BB, 4 * Hp), jnp.float32),   # per-chunk gate pre-acts
            pltpu.VMEM((BB, Hp), jnp.float32),               # h carry
            pltpu.VMEM((BB, Hp), jnp.float32),               # c carry
        ],
        compiler_params=pltpu.CompilerParams(
            dimension_semantics=("parallel", "arbitrary"),
            vmem_limit_bytes=vmem_limit,
        ),
    )(x, wih_p, whh_p, wd_p, bd_p)

    return out_p[:B, :C]


def lstm_reference(tokens, params):
    """Pure-JAX f32 reference matching PyTorch semantics (eval mode)."""
    emb = jnp.take(params["embedding"], tokens, axis=0)       # (B, T, E)
    w_ih, w_hh = params["w_ih"], params["w_hh"]
    b = params["b_ih"] + params["b_hh"]
    H = w_hh.shape[1]
    B = tokens.shape[0]

    def step(carry, x_t):
        h, c = carry
        gates = x_t @ w_ih.T + h @ w_hh.T + b
        i = jax.nn.sigmoid(gates[:, 0 * H:1 * H])
        f = jax.nn.sigmoid(gates[:, 1 * H:2 * H])
        g = jnp.tanh(gates[:, 2 * H:3 * H])
        o = jax.nn.sigmoid(gates[:, 3 * H:4 * H])
        c = f * c + i * g
        h = o * jnp.tanh(c)
        return (h, c), None

    x_tbe = jnp.transpose(emb, (1, 0, 2))
    (h, _), _ = jax.lax.scan(step, (jnp.zeros((B, H)), jnp.zeros((B, H))), x_tbe)
    logits = h @ params["w_dense"].T + params["b_dense"]
    return jax.nn.softmax(logits, axis=1)


def init_params(key, vocab_size, embedding_dim, hidden_dim, num_classes):
    ks = jax.random.split(key, 7)
    s = 0.1
    return {
        "embedding": s * jax.random.normal(ks[0], (vocab_size, embedding_dim), jnp.float32),
        "w_ih": s * jax.random.normal(ks[1], (4 * hidden_dim, embedding_dim), jnp.float32),
        "w_hh": s * jax.random.normal(ks[2], (4 * hidden_dim, hidden_dim), jnp.float32),
        "b_ih": s * jax.random.normal(ks[3], (4 * hidden_dim,), jnp.float32),
        "b_hh": s * jax.random.normal(ks[4], (4 * hidden_dim,), jnp.float32),
        "w_dense": s * jax.random.normal(ks[5], (num_classes, hidden_dim), jnp.float32),
        "b_dense": s * jax.random.normal(ks[6], (num_classes,), jnp.float32),
    }


if __name__ == "__main__":
    # Small shapes consistent with the module's forward.
    vocab_size = 50
    embedding_dim = 16
    hidden_dim = 32
    num_classes = 4
    batch = 2
    seq_len = 8

    key = jax.random.PRNGKey(0)
    k_params, k_tokens = jax.random.split(key)
    params = init_params(k_params, vocab_size, embedding_dim, hidden_dim, num_classes)
    tokens = jax.random.randint(k_tokens, (batch, seq_len), 0, vocab_size, dtype=jnp.int32)

    probs = lstm_forward(tokens, params)
    jax.block_until_ready(probs)

    assert probs.shape == (batch, num_classes)
    assert bool(jnp.all(jnp.isfinite(probs)))
    assert bool(jnp.allclose(jnp.sum(probs, axis=1), 1.0, atol=1e-5))

    # Cross-check against a pure-JAX f32 reference (bf16 matmul operands => loose tol).
    ref = lstm_reference(tokens, params)
    assert bool(jnp.allclose(probs, ref, atol=2e-2, rtol=2e-2))

    print("KERNEL_OK")
</pallas_src>

<mosaic_0001>
module attributes {stable_mosaic.version = 11 : i64} {
  func.func @lstm_kernel(%arg0: i32, %arg1: i32, %arg2: memref<1x1x64x128xbf16, #tpu.memory_space<vmem>>, %arg3: memref<128x512xbf16, #tpu.memory_space<vmem>>, %arg4: memref<128x512xbf16, #tpu.memory_space<vmem>>, %arg5: memref<128x128xbf16, #tpu.memory_space<vmem>>, %arg6: memref<1x128xf32, #tpu.memory_space<vmem>>, %arg7: memref<8x128xf32, #tpu.memory_space<vmem>>, %arg8: memref<64x512xf32, #tpu.memory_space<vmem>>, %arg9: memref<8x128xf32, #tpu.memory_space<vmem>>, %arg10: memref<8x128xf32, #tpu.memory_space<vmem>>) attributes {dimension_semantics = [#tpu.dimension_semantics<parallel>, #tpu.dimension_semantics<arbitrary>], iteration_bounds = array<i64: 1, 1>, scalar_prefetch = 0 : i64, scratch_operands = 3 : i64, tpu.core_type = #tpu.core_type<tc>, window_params = [{transform_indices = @transform_0, window_bounds = array<i64: 1, 1, 64, 128>}, {pipeline_mode = #tpu.pipeline_mode<synchronous>, transform_indices = @transform_1, window_bounds = array<i64: 128, 512>}, {pipeline_mode = #tpu.pipeline_mode<synchronous>, transform_indices = @transform_2, window_bounds = array<i64: 128, 512>}, {pipeline_mode = #tpu.pipeline_mode<synchronous>, transform_indices = @transform_3, window_bounds = array<i64: 128, 128>}, {pipeline_mode = #tpu.pipeline_mode<synchronous>, transform_indices = @transform_4, window_bounds = array<i64: 1, 128>}, {transform_indices = @transform_5, window_bounds = array<i64: 8, 128>}]} {
    %c0_i32 = arith.constant 0 : i32
    %0 = arith.cmpi eq, %arg1, %c0_i32 : i32
    %1 = arith.extui %0 : i1 to i32
    %c0_i32_0 = arith.constant 0 : i32
    %2 = arith.cmpi ne, %1, %c0_i32_0 : i32
    scf.if %2 {
      %cst_69 = arith.constant 0.000000e+00 : f32
      %272 = vector.broadcast %cst_69 : f32 to vector<8x128xf32>
      %c0_70 = arith.constant 0 : index
      %c0_71 = arith.constant 0 : index
      %273 = vector.load %arg9[%c0_70, %c0_71] : memref<8x128xf32, #tpu.memory_space<vmem>>, vector<8x128xf32>
      tpu.vector_store %arg9[%c0_70, %c0_71], %272 {strides = array<i32>} : memref<8x128xf32, #tpu.memory_space<vmem>>, vector<8x128xf32>,
      %cst_72 = arith.constant 0.000000e+00 : f32
      %274 = vector.broadcast %cst_72 : f32 to vector<8x128xf32>
      %c0_73 = arith.constant 0 : index
      %c0_74 = arith.constant 0 : index
      %275 = vector.load %arg10[%c0_73, %c0_74] : memref<8x128xf32, #tpu.memory_space<vmem>>, vector<8x128xf32>
      tpu.vector_store %arg10[%c0_73, %c0_74], %274 {strides = array<i32>} : memref<8x128xf32, #tpu.memory_space<vmem>>, vector<8x128xf32>,
    } else {
    }
    %c0 = arith.constant 0 : index
    %c0_1 = arith.constant 0 : index
    %c0_2 = arith.constant 0 : index
    %c0_3 = arith.constant 0 : index
    %3 = vector.load %arg2[%c0, %c0_1, %c0_2, %c0_3] : memref<1x1x64x128xbf16, #tpu.memory_space<vmem>>, vector<1x1x64x128xbf16>
    %4 = vector.shape_cast %3 : vector<1x1x64x128xbf16> to vector<64x128xbf16>
    %c0_4 = arith.constant 0 : index
    %c0_5 = arith.constant 0 : index
    %5 = vector.load %arg3[%c0_4, %c0_5] : memref<128x512xbf16, #tpu.memory_space<vmem>>, vector<128x512xbf16>
    %cst = arith.constant dense<0.000000e+00> : vector<64x512xf32>
    %6 = tpu.matmul %4, %5, %cst {dimension_numbers = #tpu.dot_dimension_numbers<[1], [0], [0], [1], [0, 0, 1, 1], [], []>} : vector<64x128xbf16>, vector<128x512xbf16>, vector<64x512xf32> -> vector<64x512xf32>
    %c0_6 = arith.constant 0 : index
    %c0_7 = arith.constant 0 : index
    %7 = vector.load %arg8[%c0_6, %c0_7] : memref<64x512xf32, #tpu.memory_space<vmem>>, vector<64x512xf32>
    tpu.vector_store %arg8[%c0_6, %c0_7], %6 {strides = array<i32>} : memref<64x512xf32, #tpu.memory_space<vmem>>, vector<64x512xf32>,
    %c0_8 = arith.constant 0 : index
    %c0_9 = arith.constant 0 : index
    %8 = vector.load %arg4[%c0_8, %c0_9] : memref<128x512xbf16, #tpu.memory_space<vmem>>, vector<128x512xbf16>
    %c0_10 = arith.constant 0 : index
    %c0_11 = arith.constant 0 : index
    %9 = vector.load %arg9[%c0_10, %c0_11] : memref<8x128xf32, #tpu.memory_space<vmem>>, vector<8x128xf32>
    %c0_12 = arith.constant 0 : index
    %c0_13 = arith.constant 0 : index
    %10 = vector.load %arg10[%c0_12, %c0_13] : memref<8x128xf32, #tpu.memory_space<vmem>>, vector<8x128xf32>
    %c0_i32_14 = arith.constant 0 : i32
    %c8_i32 = arith.constant 8 : i32
    %11 = arith.muli %c0_i32_14, %c8_i32 : i32
    %12 = tpu.assume_multiple %11, 8 : i32
    %13 = arith.index_cast %12 : i32 to index
    %c0_15 = arith.constant 0 : index
    %14 = vector.load %arg8[%13, %c0_15] : memref<64x512xf32, #tpu.memory_space<vmem>>, vector<8x512xf32>
    %15 = arith.truncf %9 : vector<8x128xf32> to vector<8x128xbf16>
    %cst_16 = arith.constant dense<0.000000e+00> : vector<8x512xf32>
    %16 = tpu.matmul %15, %8, %cst_16 {dimension_numbers = #tpu.dot_dimension_numbers<[1], [0], [0], [1], [0, 0, 1, 1], [], []>} : vector<8x128xbf16>, vector<128x512xbf16>, vector<8x512xf32> -> vector<8x512xf32>
    %17 = arith.addf %14, %16 : vector<8x512xf32>
    %18 = vector.extract_strided_slice %17 {offsets = [0, 0], sizes = [8, 128], strides = [1, 1]} : vector<8x512xf32> to vector<8x128xf32>
    %19 = arith.negf %18 : vector<8x128xf32>
    %20 = math.exp %19 : vector<8x128xf32>
    %cst_17 = arith.constant 1.000000e+00 : f32
    %21 = vector.broadcast %cst_17 : f32 to vector<8x128xf32>
    %22 = arith.addf %21, %20 : vector<8x128xf32>
    %23 = arith.divf %21, %22 : vector<8x128xf32>
    %24 = vector.extract_strided_slice %17 {offsets = [0, 128], sizes = [8, 128], strides = [1, 1]} : vector<8x512xf32> to vector<8x128xf32>
    %25 = arith.negf %24 : vector<8x128xf32>
    %26 = math.exp %25 : vector<8x128xf32>
    %cst_18 = arith.constant 1.000000e+00 : f32
    %27 = vector.broadcast %cst_18 : f32 to vector<8x128xf32>
    %28 = arith.addf %27, %26 : vector<8x128xf32>
    %29 = arith.divf %27, %28 : vector<8x128xf32>
    %30 = vector.extract_strided_slice %17 {offsets = [0, 256], sizes = [8, 128], strides = [1, 1]} : vector<8x512xf32> to vector<8x128xf32>
    %31 = math.tanh %30 : vector<8x128xf32>
    %32 = vector.extract_strided_slice %17 {offsets = [0, 384], sizes = [8, 128], strides = [1, 1]} : vector<8x512xf32> to vector<8x128xf32>
    %33 = arith.negf %32 : vector<8x128xf32>
    %34 = math.exp %33 : vector<8x128xf32>
    %cst_19 = arith.constant 1.000000e+00 : f32
    %35 = vector.broadcast %cst_19 : f32 to vector<8x128xf32>
    %36 = arith.addf %35, %34 : vector<8x128xf32>
    %37 = arith.divf %35, %36 : vector<8x128xf32>
    %38 = arith.mulf %29, %10 : vector<8x128xf32>
    %39 = arith.mulf %23, %31 : vector<8x128xf32>
    %40 = arith.addf %38, %39 : vector<8x128xf32>
    %41 = math.tanh %40 : vector<8x128xf32>
    %42 = arith.mulf %37, %41 : vector<8x128xf32>
    %c1_i32 = arith.constant 1 : i32
    %c8_i32_20 = arith.constant 8 : i32
    %43 = arith.muli %c1_i32, %c8_i32_20 : i32
    %44 = tpu.assume_multiple %43, 8 : i32
    %45 = arith.index_cast %44 : i32 to index
    %c0_21 = arith.constant 0 : index
    %46 = vector.load %arg8[%45, %c0_21] : memref<64x512xf32, #tpu.memory_space<vmem>>, vector<8x512xf32>
    %47 = arith.truncf %42 : vector<8x128xf32> to vector<8x128xbf16>
    %cst_22 = arith.constant dense<0.000000e+00> : vector<8x512xf32>
    %48 = tpu.matmul %47, %8, %cst_22 {dimension_numbers = #tpu.dot_dimension_numbers<[1], [0], [0], [1], [0, 0, 1, 1], [], []>} : vector<8x128xbf16>, vector<128x512xbf16>, vector<8x512xf32> -> vector<8x512xf32>
    %49 = arith.addf %46, %48 : vector<8x512xf32>
    %50 = vector.extract_strided_slice %49 {offsets = [0, 0], sizes = [8, 128], strides = [1, 1]} : vector<8x512xf32> to vector<8x128xf32>
    %51 = arith.negf %50 : vector<8x128xf32>
    %52 = math.exp %51 : vector<8x128xf32>
    %cst_23 = arith.constant 1.000000e+00 : f32
    %53 = vector.broadcast %cst_23 : f32 to vector<8x128xf32>
    %54 = arith.addf %53, %52 : vector<8x128xf32>
    %55 = arith.divf %53, %54 : vector<8x128xf32>
    %56 = vector.extract_strided_slice %49 {offsets = [0, 128], sizes = [8, 128], strides = [1, 1]} : vector<8x512xf32> to vector<8x128xf32>
    %57 = arith.negf %56 : vector<8x128xf32>
    %58 = math.exp %57 : vector<8x128xf32>
    %cst_24 = arith.constant 1.000000e+00 : f32
    %59 = vector.broadcast %cst_24 : f32 to vector<8x128xf32>
    %60 = arith.addf %59, %58 : vector<8x128xf32>
    %61 = arith.divf %59, %60 : vector<8x128xf32>
    %62 = vector.extract_strided_slice %49 {offsets = [0, 256], sizes = [8, 128], strides = [1, 1]} : vector<8x512xf32> to vector<8x128xf32>
    %63 = math.tanh %62 : vector<8x128xf32>
    %64 = vector.extract_strided_slice %49 {offsets = [0, 384], sizes = [8, 128], strides = [1, 1]} : vector<8x512xf32> to vector<8x128xf32>
    %65 = arith.negf %64 : vector<8x128xf32>
    %66 = math.exp %65 : vector<8x128xf32>
    %cst_25 = arith.constant 1.000000e+00 : f32
    %67 = vector.broadcast %cst_25 : f32 to vector<8x128xf32>
    %68 = arith.addf %67, %66 : vector<8x128xf32>
    %69 = arith.divf %67, %68 : vector<8x128xf32>
    %70 = arith.mulf %61, %40 : vector<8x128xf32>
    %71 = arith.mulf %55, %63 : vector<8x128xf32>
    %72 = arith.addf %70, %71 : vector<8x128xf32>
    %73 = math.tanh %72 : vector<8x128xf32>
    %74 = arith.mulf %69, %73 : vector<8x128xf32>
    %c2_i32 = arith.constant 2 : i32
    %c8_i32_26 = arith.constant 8 : i32
    %75 = arith.muli %c2_i32, %c8_i32_26 : i32
    %76 = tpu.assume_multiple %75, 8 : i32
    %77 = arith.index_cast %76 : i32 to index
    %c0_27 = arith.constant 0 : index
    %78 = vector.load %arg8[%77, %c0_27] : memref<64x512xf32, #tpu.memory_space<vmem>>, vector<8x512xf32>
    %79 = arith.truncf %74 : vector<8x128xf32> to vector<8x128xbf16>
    %cst_28 = arith.constant dense<0.000000e+00> : vector<8x512xf32>
    %80 = tpu.matmul %79, %8, %cst_28 {dimension_numbers = #tpu.dot_dimension_numbers<[1], [0], [0], [1], [0, 0, 1, 1], [], []>} : vector<8x128xbf16>, vector<128x512xbf16>, vector<8x512xf32> -> vector<8x512xf32>
    %81 = arith.addf %78, %80 : vector<8x512xf32>
    %82 = vector.extract_strided_slice %81 {offsets = [0, 0], sizes = [8, 128], strides = [1, 1]} : vector<8x512xf32> to vector<8x128xf32>
    %83 = arith.negf %82 : vector<8x128xf32>
    %84 = math.exp %83 : vector<8x128xf32>
    %cst_29 = arith.constant 1.000000e+00 : f32
    %85 = vector.broadcast %cst_29 : f32 to vector<8x128xf32>
    %86 = arith.addf %85, %84 : vector<8x128xf32>
    %87 = arith.divf %85, %86 : vector<8x128xf32>
    %88 = vector.extract_strided_slice %81 {offsets = [0, 128], sizes = [8, 128], strides = [1, 1]} : vector<8x512xf32> to vector<8x128xf32>
    %89 = arith.negf %88 : vector<8x128xf32>
    %90 = math.exp %89 : vector<8x128xf32>
    %cst_30 = arith.constant 1.000000e+00 : f32
    %91 = vector.broadcast %cst_30 : f32 to vector<8x128xf32>
    %92 = arith.addf %91, %90 : vector<8x128xf32>
    %93 = arith.divf %91, %92 : vector<8x128xf32>
    %94 = vector.extract_strided_slice %81 {offsets = [0, 256], sizes = [8, 128], strides = [1, 1]} : vector<8x512xf32> to vector<8x128xf32>
    %95 = math.tanh %94 : vector<8x128xf32>
    %96 = vector.extract_strided_slice %81 {offsets = [0, 384], sizes = [8, 128], strides = [1, 1]} : vector<8x512xf32> to vector<8x128xf32>
    %97 = arith.negf %96 : vector<8x128xf32>
    %98 = math.exp %97 : vector<8x128xf32>
    %cst_31 = arith.constant 1.000000e+00 : f32
    %99 = vector.broadcast %cst_31 : f32 to vector<8x128xf32>
    %100 = arith.addf %99, %98 : vector<8x128xf32>
    %101 = arith.divf %99, %100 : vector<8x128xf32>
    %102 = arith.mulf %93, %72 : vector<8x128xf32>
    %103 = arith.mulf %87, %95 : vector<8x128xf32>
    %104 = arith.addf %102, %103 : vector<8x128xf32>
    %105 = math.tanh %104 : vector<8x128xf32>
    %106 = arith.mulf %101, %105 : vector<8x128xf32>
    %c3_i32 = arith.constant 3 : i32
    %c8_i32_32 = arith.constant 8 : i32
    %107 = arith.muli %c3_i32, %c8_i32_32 : i32
    %108 = tpu.assume_multiple %107, 8 : i32
    %109 = arith.index_cast %108 : i32 to index
    %c0_33 = arith.constant 0 : index
    %110 = vector.load %arg8[%109, %c0_33] : memref<64x512xf32, #tpu.memory_space<vmem>>, vector<8x512xf32>
    %111 = arith.truncf %106 : vector<8x128xf32> to vector<8x128xbf16>
    %cst_34 = arith.constant dense<0.000000e+00> : vector<8x512xf32>
    %112 = tpu.matmul %111, %8, %cst_34 {dimension_numbers = #tpu.dot_dimension_numbers<[1], [0], [0], [1], [0, 0, 1, 1], [], []>} : vector<8x128xbf16>, vector<128x512xbf16>, vector<8x512xf32> -> vector<8x512xf32>
    %113 = arith.addf %110, %112 : vector<8x512xf32>
    %114 = vector.extract_strided_slice %113 {offsets = [0, 0], sizes = [8, 128], strides = [1, 1]} : vector<8x512xf32> to vector<8x128xf32>
    %115 = arith.negf %114 : vector<8x128xf32>
    %116 = math.exp %115 : vector<8x128xf32>
    %cst_35 = arith.constant 1.000000e+00 : f32
    %117 = vector.broadcast %cst_35 : f32 to vector<8x128xf32>
    %118 = arith.addf %117, %116 : vector<8x128xf32>
    %119 = arith.divf %117, %118 : vector<8x128xf32>
    %120 = vector.extract_strided_slice %113 {offsets = [0, 128], sizes = [8, 128], strides = [1, 1]} : vector<8x512xf32> to vector<8x128xf32>
    %121 = arith.negf %120 : vector<8x128xf32>
    %122 = math.exp %121 : vector<8x128xf32>
    %cst_36 = arith.constant 1.000000e+00 : f32
    %123 = vector.broadcast %cst_36 : f32 to vector<8x128xf32>
    %124 = arith.addf %123, %122 : vector<8x128xf32>
    %125 = arith.divf %123, %124 : vector<8x128xf32>
    %126 = vector.extract_strided_slice %113 {offsets = [0, 256], sizes = [8, 128], strides = [1, 1]} : vector<8x512xf32> to vector<8x128xf32>
    %127 = math.tanh %126 : vector<8x128xf32>
    %128 = vector.extract_strided_slice %113 {offsets = [0, 384], sizes = [8, 128], strides = [1, 1]} : vector<8x512xf32> to vector<8x128xf32>
    %129 = arith.negf %128 : vector<8x128xf32>
    %130 = math.exp %129 : vector<8x128xf32>
    %cst_37 = arith.constant 1.000000e+00 : f32
    %131 = vector.broadcast %cst_37 : f32 to vector<8x128xf32>
    %132 = arith.addf %131, %130 : vector<8x128xf32>
    %133 = arith.divf %131, %132 : vector<8x128xf32>
    %134 = arith.mulf %125, %104 : vector<8x128xf32>
    %135 = arith.mulf %119, %127 : vector<8x128xf32>
    %136 = arith.addf %134, %135 : vector<8x128xf32>
    %137 = math.tanh %136 : vector<8x128xf32>
    %138 = arith.mulf %133, %137 : vector<8x128xf32>
    %c4_i32 = arith.constant 4 : i32
    %c8_i32_38 = arith.constant 8 : i32
    %139 = arith.muli %c4_i32, %c8_i32_38 : i32
    %140 = tpu.assume_multiple %139, 8 : i32
    %141 = arith.index_cast %140 : i32 to index
    %c0_39 = arith.constant 0 : index
    %142 = vector.load %arg8[%141, %c0_39] : memref<64x512xf32, #tpu.memory_space<vmem>>, vector<8x512xf32>
    %143 = arith.truncf %138 : vector<8x128xf32> to vector<8x128xbf16>
    %cst_40 = arith.constant dense<0.000000e+00> : vector<8x512xf32>
    %144 = tpu.matmul %143, %8, %cst_40 {dimension_numbers = #tpu.dot_dimension_numbers<[1], [0], [0], [1], [0, 0, 1, 1], [], []>} : vector<8x128xbf16>, vector<128x512xbf16>, vector<8x512xf32> -> vector<8x512xf32>
    %145 = arith.addf %142, %144 : vector<8x512xf32>
    %146 = vector.extract_strided_slice %145 {offsets = [0, 0], sizes = [8, 128], strides = [1, 1]} : vector<8x512xf32> to vector<8x128xf32>
    %147 = arith.negf %146 : vector<8x128xf32>
    %148 = math.exp %147 : vector<8x128xf32>
    %cst_41 = arith.constant 1.000000e+00 : f32
    %149 = vector.broadcast %cst_41 : f32 to vector<8x128xf32>
    %150 = arith.addf %149, %148 : vector<8x128xf32>
    %151 = arith.divf %149, %150 : vector<8x128xf32>
    %152 = vector.extract_strided_slice %145 {offsets = [0, 128], sizes = [8, 128], strides = [1, 1]} : vector<8x512xf32> to vector<8x128xf32>
    %153 = arith.negf %152 : vector<8x128xf32>
    %154 = math.exp %153 : vector<8x128xf32>
    %cst_42 = arith.constant 1.000000e+00 : f32
    %155 = vector.broadcast %cst_42 : f32 to vector<8x128xf32>
    %156 = arith.addf %155, %154 : vector<8x128xf32>
    %157 = arith.divf %155, %156 : vector<8x128xf32>
    %158 = vector.extract_strided_slice %145 {offsets = [0, 256], sizes = [8, 128], strides = [1, 1]} : vector<8x512xf32> to vector<8x128xf32>
    %159 = math.tanh %158 : vector<8x128xf32>
    %160 = vector.extract_strided_slice %145 {offsets = [0, 384], sizes = [8, 128], strides = [1, 1]} : vector<8x512xf32> to vector<8x128xf32>
    %161 = arith.negf %160 : vector<8x128xf32>
    %162 = math.exp %161 : vector<8x128xf32>
    %cst_43 = arith.constant 1.000000e+00 : f32
    %163 = vector.broadcast %cst_43 : f32 to vector<8x128xf32>
    %164 = arith.addf %163, %162 : vector<8x128xf32>
    %165 = arith.divf %163, %164 : vector<8x128xf32>
    %166 = arith.mulf %157, %136 : vector<8x128xf32>
    %167 = arith.mulf %151, %159 : vector<8x128xf32>
    %168 = arith.addf %166, %167 : vector<8x128xf32>
    %169 = math.tanh %168 : vector<8x128xf32>
    %170 = arith.mulf %165, %169 : vector<8x128xf32>
    %c5_i32 = arith.constant 5 : i32
    %c8_i32_44 = arith.constant 8 : i32
    %171 = arith.muli %c5_i32, %c8_i32_44 : i32
    %172 = tpu.assume_multiple %171, 8 : i32
    %173 = arith.index_cast %172 : i32 to index
    %c0_45 = arith.constant 0 : index
    %174 = vector.load %arg8[%173, %c0_45] : memref<64x512xf32, #tpu.memory_space<vmem>>, vector<8x512xf32>
    %175 = arith.truncf %170 : vector<8x128xf32> to vector<8x128xbf16>
    %cst_46 = arith.constant dense<0.000000e+00> : vector<8x512xf32>
    %176 = tpu.matmul %175, %8, %cst_46 {dimension_numbers = #tpu.dot_dimension_numbers<[1], [0], [0], [1], [0, 0, 1, 1], [], []>} : vector<8x128xbf16>, vector<128x512xbf16>, vector<8x512xf32> -> vector<8x512xf32>
    %177 = arith.addf %174, %176 : vector<8x512xf32>
    %178 = vector.extract_strided_slice %177 {offsets = [0, 0], sizes = [8, 128], strides = [1, 1]} : vector<8x512xf32> to vector<8x128xf32>
    %179 = arith.negf %178 : vector<8x128xf32>
    %180 = math.exp %179 : vector<8x128xf32>
    %cst_47 = arith.constant 1.000000e+00 : f32
    %181 = vector.broadcast %cst_47 : f32 to vector<8x128xf32>
    %182 = arith.addf %181, %180 : vector<8x128xf32>
    %183 = arith.divf %181, %182 : vector<8x128xf32>
    %184 = vector.extract_strided_slice %177 {offsets = [0, 128], sizes = [8, 128], strides = [1, 1]} : vector<8x512xf32> to vector<8x128xf32>
    %185 = arith.negf %184 : vector<8x128xf32>
    %186 = math.exp %185 : vector<8x128xf32>
    %cst_48 = arith.constant 1.000000e+00 : f32
    %187 = vector.broadcast %cst_48 : f32 to vector<8x128xf32>
    %188 = arith.addf %187, %186 : vector<8x128xf32>
    %189 = arith.divf %187, %188 : vector<8x128xf32>
    %190 = vector.extract_strided_slice %177 {offsets = [0, 256], sizes = [8, 128], strides = [1, 1]} : vector<8x512xf32> to vector<8x128xf32>
    %191 = math.tanh %190 : vector<8x128xf32>
    %192 = vector.extract_strided_slice %177 {offsets = [0, 384], sizes = [8, 128], strides = [1, 1]} : vector<8x512xf32> to vector<8x128xf32>
    %193 = arith.negf %192 : vector<8x128xf32>
    %194 = math.exp %193 : vector<8x128xf32>
    %cst_49 = arith.constant 1.000000e+00 : f32
    %195 = vector.broadcast %cst_49 : f32 to vector<8x128xf32>
    %196 = arith.addf %195, %194 : vector<8x128xf32>
    %197 = arith.divf %195, %196 : vector<8x128xf32>
    %198 = arith.mulf %189, %168 : vector<8x128xf32>
    %199 = arith.mulf %183, %191 : vector<8x128xf32>
    %200 = arith.addf %198, %199 : vector<8x128xf32>
    %201 = math.tanh %200 : vector<8x128xf32>
    %202 = arith.mulf %197, %201 : vector<8x128xf32>
    %c6_i32 = arith.constant 6 : i32
    %c8_i32_50 = arith.constant 8 : i32
    %203 = arith.muli %c6_i32, %c8_i32_50 : i32
    %204 = tpu.assume_multiple %203, 8 : i32
    %205 = arith.index_cast %204 : i32 to index
    %c0_51 = arith.constant 0 : index
    %206 = vector.load %arg8[%205, %c0_51] : memref<64x512xf32, #tpu.memory_space<vmem>>, vector<8x512xf32>
    %207 = arith.truncf %202 : vector<8x128xf32> to vector<8x128xbf16>
    %cst_52 = arith.constant dense<0.000000e+00> : vector<8x512xf32>
    %208 = tpu.matmul %207, %8, %cst_52 {dimension_numbers = #tpu.dot_dimension_numbers<[1], [0], [0], [1], [0, 0, 1, 1], [], []>} : vector<8x128xbf16>, vector<128x512xbf16>, vector<8x512xf32> -> vector<8x512xf32>
    %209 = arith.addf %206, %208 : vector<8x512xf32>
    %210 = vector.extract_strided_slice %209 {offsets = [0, 0], sizes = [8, 128], strides = [1, 1]} : vector<8x512xf32> to vector<8x128xf32>
    %211 = arith.negf %210 : vector<8x128xf32>
    %212 = math.exp %211 : vector<8x128xf32>
    %cst_53 = arith.constant 1.000000e+00 : f32
    %213 = vector.broadcast %cst_53 : f32 to vector<8x128xf32>
    %214 = arith.addf %213, %212 : vector<8x128xf32>
    %215 = arith.divf %213, %214 : vector<8x128xf32>
    %216 = vector.extract_strided_slice %209 {offsets = [0, 128], sizes = [8, 128], strides = [1, 1]} : vector<8x512xf32> to vector<8x128xf32>
    %217 = arith.negf %216 : vector<8x128xf32>
    %218 = math.exp %217 : vector<8x128xf32>
    %cst_54 = arith.constant 1.000000e+00 : f32
    %219 = vector.broadcast %cst_54 : f32 to vector<8x128xf32>
    %220 = arith.addf %219, %218 : vector<8x128xf32>
    %221 = arith.divf %219, %220 : vector<8x128xf32>
    %222 = vector.extract_strided_slice %209 {offsets = [0, 256], sizes = [8, 128], strides = [1, 1]} : vector<8x512xf32> to vector<8x128xf32>
    %223 = math.tanh %222 : vector<8x128xf32>
    %224 = vector.extract_strided_slice %209 {offsets = [0, 384], sizes = [8, 128], strides = [1, 1]} : vector<8x512xf32> to vector<8x128xf32>
    %225 = arith.negf %224 : vector<8x128xf32>
    %226 = math.exp %225 : vector<8x128xf32>
    %cst_55 = arith.constant 1.000000e+00 : f32
    %227 = vector.broadcast %cst_55 : f32 to vector<8x128xf32>
    %228 = arith.addf %227, %226 : vector<8x128xf32>
    %229 = arith.divf %227, %228 : vector<8x128xf32>
    %230 = arith.mulf %221, %200 : vector<8x128xf32>
    %231 = arith.mulf %215, %223 : vector<8x128xf32>
    %232 = arith.addf %230, %231 : vector<8x128xf32>
    %233 = math.tanh %232 : vector<8x128xf32>
    %234 = arith.mulf %229, %233 : vector<8x128xf32>
    %c7_i32 = arith.constant 7 : i32
    %c8_i32_56 = arith.constant 8 : i32
    %235 = arith.muli %c7_i32, %c8_i32_56 : i32
    %236 = tpu.assume_multiple %235, 8 : i32
    %237 = arith.index_cast %236 : i32 to index
    %c0_57 = arith.constant 0 : index
    %238 = vector.load %arg8[%237, %c0_57] : memref<64x512xf32, #tpu.memory_space<vmem>>, vector<8x512xf32>
    %239 = arith.truncf %234 : vector<8x128xf32> to vector<8x128xbf16>
    %cst_58 = arith.constant dense<0.000000e+00> : vector<8x512xf32>
    %240 = tpu.matmul %239, %8, %cst_58 {dimension_numbers = #tpu.dot_dimension_numbers<[1], [0], [0], [1], [0, 0, 1, 1], [], []>} : vector<8x128xbf16>, vector<128x512xbf16>, vector<8x512xf32> -> vector<8x512xf32>
    %241 = arith.addf %238, %240 : vector<8x512xf32>
    %242 = vector.extract_strided_slice %241 {offsets = [0, 0], sizes = [8, 128], strides = [1, 1]} : vector<8x512xf32> to vector<8x128xf32>
    %243 = arith.negf %242 : vector<8x128xf32>
    %244 = math.exp %243 : vector<8x128xf32>
    %cst_59 = arith.constant 1.000000e+00 : f32
    %245 = vector.broadcast %cst_59 : f32 to vector<8x128xf32>
    %246 = arith.addf %245, %244 : vector<8x128xf32>
    %247 = arith.divf %245, %246 : vector<8x128xf32>
    %248 = vector.extract_strided_slice %241 {offsets = [0, 128], sizes = [8, 128], strides = [1, 1]} : vector<8x512xf32> to vector<8x128xf32>
    %249 = arith.negf %248 : vector<8x128xf32>
    %250 = math.exp %249 : vector<8x128xf32>
    %cst_60 = arith.constant 1.000000e+00 : f32
    %251 = vector.broadcast %cst_60 : f32 to vector<8x128xf32>
    %252 = arith.addf %251, %250 : vector<8x128xf32>
    %253 = arith.divf %251, %252 : vector<8x128xf32>
    %254 = vector.extract_strided_slice %241 {offsets = [0, 256], sizes = [8, 128], strides = [1, 1]} : vector<8x512xf32> to vector<8x128xf32>
    %255 = math.tanh %254 : vector<8x128xf32>
    %256 = vector.extract_strided_slice %241 {offsets = [0, 384], sizes = [8, 128], strides = [1, 1]} : vector<8x512xf32> to vector<8x128xf32>
    %257 = arith.negf %256 : vector<8x128xf32>
    %258 = math.exp %257 : vector<8x128xf32>
    %cst_61 = arith.constant 1.000000e+00 : f32
    %259 = vector.broadcast %cst_61 : f32 to vector<8x128xf32>
    %260 = arith.addf %259, %258 : vector<8x128xf32>
    %261 = arith.divf %259, %260 : vector<8x128xf32>
    %262 = arith.mulf %253, %232 : vector<8x128xf32>
    %263 = arith.mulf %247, %255 : vector<8x128xf32>
    %264 = arith.addf %262, %263 : vector<8x128xf32>
    %265 = math.tanh %264 : vector<8x128xf32>
    %266 = arith.mulf %261, %265 : vector<8x128xf32>
    %c8_i32_62 = arith.constant 8 : i32
    %c0_63 = arith.constant 0 : index
    %c0_64 = arith.constant 0 : index
    %267 = vector.load %arg9[%c0_63, %c0_64] : memref<8x128xf32, #tpu.memory_space<vmem>>, vector<8x128xf32>
    tpu.vector_store %arg9[%c0_63, %c0_64], %266 {strides = array<i32>} : memref<8x128xf32, #tpu.memory_space<vmem>>, vector<8x128xf32>,
    %c0_65 = arith.constant 0 : index
    %c0_66 = arith.constant 0 : index
    %268 = vector.load %arg10[%c0_65, %c0_66] : memref<8x128xf32, #tpu.memory_space<vmem>>, vector<8x128xf32>
    tpu.vector_store %arg10[%c0_65, %c0_66], %264 {strides = array<i32>} : memref<8x128xf32, #tpu.memory_space<vmem>>, vector<8x128xf32>,
    %c0_i32_67 = arith.constant 0 : i32
    %269 = arith.cmpi eq, %arg1, %c0_i32_67 : i32
    %270 = arith.extui %269 : i1 to i32
    %c0_i32_68 = arith.constant 0 : i32
    %271 = arith.cmpi ne, %270, %c0_i32_68 : i32
    scf.if %271 {
      %272 = arith.truncf %266 : vector<8x128xf32> to vector<8x128xbf16>
      %c0_69 = arith.constant 0 : index
      %c0_70 = arith.constant 0 : index
      %273 = vector.load %arg5[%c0_69, %c0_70] : memref<128x128xbf16, #tpu.memory_space<vmem>>, vector<128x128xbf16>
      %cst_71 = arith.constant dense<0.000000e+00> : vector<8x128xf32>
      %274 = tpu.matmul %272, %273, %cst_71 {dimension_numbers = #tpu.dot_dimension_numbers<[1], [0], [0], [1], [0, 0, 1, 1], [], []>} : vector<8x128xbf16>, vector<128x128xbf16>, vector<8x128xf32> -> vector<8x128xf32>
      %c0_72 = arith.constant 0 : index
      %c0_73 = arith.constant 0 : index
      %275 = vector.load %arg6[%c0_72, %c0_73] : memref<1x128xf32, #tpu.memory_space<vmem>>, vector<1x128xf32>
      %276 = vector.broadcast %275 : vector<1x128xf32> to vector<8x128xf32>
      %277 = arith.addf %274, %276 : vector<8x128xf32>
      %278 = tpu.iota {dimensions = array<i32: 1>} : vector<8x128xi32>
      %c4_i32_74 = arith.constant 4 : i32
      %279 = vector.broadcast %c4_i32_74 : i32 to vector<8x128xi32>
      %280 = arith.cmpi slt, %278, %279 : vector<8x128xi32>
      %cst_75 = arith.constant -1.000000e+30 : f32
      %281 = vector.broadcast %cst_75 : f32 to vector<8x128xf32>
      %282 = arith.select %280, %277, %281 : vector<8x128xi1>, vector<8x128xf32>
      %cst_76 = arith.constant dense<0xFF800000> : vector<8xf32>
      %283 = vector.multi_reduction <maximumf>, %282, %cst_76 [1] : vector<8x128xf32> to vector<8xf32>
      %284 = vector.shape_cast %283 : vector<8xf32> to vector<8x1xf32>
      %285 = vector.broadcast %284 : vector<8x1xf32> to vector<8x128xf32>
      %286 = arith.subf %282, %285 : vector<8x128xf32>
      %287 = math.exp %286 : vector<8x128xf32>
      %cst_77 = arith.constant dense<0.000000e+00> : vector<8xf32>
      %288 = vector.multi_reduction <add>, %287, %cst_77 [1] : vector<8x128xf32> to vector<8xf32>
      %289 = vector.shape_cast %288 : vector<8xf32> to vector<8x1xf32>
      %290 = vector.broadcast %289 : vector<8x1xf32> to vector<8x128xf32>
      %291 = arith.divf %287, %290 : vector<8x128xf32>
      %c0_78 = arith.constant 0 : index
      %c0_79 = arith.constant 0 : index
      %292 = vector.load %arg7[%c0_78, %c0_79] : memref<8x128xf32, #tpu.memory_space<vmem>>, vector<8x128xf32>
      tpu.vector_store %arg7[%c0_78, %c0_79], %291 {strides = array<i32>} : memref<8x128xf32, #tpu.memory_space<vmem>>, vector<8x128xf32>,
    } else {
    }
    return
  }
  func.func @transform_0(%arg0: i32, %arg1: i32) -> (i32, i32, i32, i32) {
    %c0_i32 = arith.constant 0 : i32
    %c0_i32_0 = arith.constant 0 : i32
    %c0_i32_1 = arith.constant 0 : i32
    return %arg0, %arg1, %c0_i32, %c0_i32_0 : i32, i32, i32, i32
  }
  func.func @transform_1(%arg0: i32, %arg1: i32) -> (i32, i32) {
    %c0_i32 = arith.constant 0 : i32
    %c0_i32_0 = arith.constant 0 : i32
    %c0_i32_1 = arith.constant 0 : i32
    return %c0_i32, %c0_i32_0 : i32, i32
  }
  func.func @transform_2(%arg0: i32, %arg1: i32) -> (i32, i32) {
    %c0_i32 = arith.constant 0 : i32
    %c0_i32_0 = arith.constant 0 : i32
    %c0_i32_1 = arith.constant 0 : i32
    return %c0_i32, %c0_i32_0 : i32, i32
  }
  func.func @transform_3(%arg0: i32, %arg1: i32) -> (i32, i32) {
    %c0_i32 = arith.constant 0 : i32
    %c0_i32_0 = arith.constant 0 : i32
    %c0_i32_1 = arith.constant 0 : i32
    return %c0_i32, %c0_i32_0 : i32, i32
  }
  func.func @transform_4(%arg0: i32, %arg1: i32) -> (i32, i32) {
    %c0_i32 = arith.constant 0 : i32
    %c0_i32_0 = arith.constant 0 : i32
    %c0_i32_1 = arith.constant 0 : i32
    return %c0_i32, %c0_i32_0 : i32, i32
  }
  func.func @transform_5(%arg0: i32, %arg1: i32) -> (i32, i32) {
    %c0_i32 = arith.constant 0 : i32
    %c0_i32_0 = arith.constant 0 : i32
    return %arg0, %c0_i32 : i32, i32
  }
}

</mosaic_0001>

<llo_original>
// kernel: tpu_custom_call.1
$region0: #{tpu_custom_call.1}
  #allocation0 [shape = 'u32[]', space=smem, size = 0x4, offset = 0x4, fixed_abs, tag = 'smem constant byte address 0x4 - core index']
  #allocation1 [shape = 'u32[144,128]{1,0:T(1,128)}', space=vmem, size = 0x12000, scoped, tag = 'internal scratch']
  #allocation2 [shape = 'f32[64,512]{1,0:T(8,128)}', space=vmem, size = 0x20000, scoped, tag = 'scratch operand']
  #allocation3 [shape = 'f32[8,128]{1,0:T(8,128)}', space=vmem, size = 0x1000, scoped, tag = 'scratch operand']
  #allocation4 [shape = 'f32[8,128]{1,0:T(8,128)}', space=vmem, size = 0x1000, scoped, tag = 'scratch operand']
  %s0 = inlined_call_operand.hbm [shape: bf16[1,1,64,128], index: 0, kind: input, shape index: {}]
  %s1 = inlined_call_operand.hbm [shape: bf16[128,512], index: 1, kind: input, shape index: {}]
  %s2 = inlined_call_operand.hbm [shape: bf16[128,512], index: 2, kind: input, shape index: {}]
  %s3 = inlined_call_operand.hbm [shape: bf16[128,128], index: 3, kind: input, shape index: {}]
  %s4 = inlined_call_operand.vmem [shape: f32[1,128], index: 4, kind: input, shape index: {}]
  %s5 = inlined_call_operand.hbm [shape: f32[8,128], index: 5, kind: output, shape index: {}]
  %s6 = sld [smem:[#allocation0]]
  $region54: #{tpu_custom_call.1} parent=0
    _
  %s8 = ssub.s32 1, %s6
  %s9 = scalar_select 0, %s8, %s6
  $region1: #{tpu_custom_call.1} parent=0
    #allocation5 [shape = 'u8[16384]{0}', space=vmem, size = 0x4000, scoped, tag = 'input window, operand 0, single buffered']
    #allocation6 [shape = 's32[1]{0}', space=sflag, size = 0x4, scoped, tag = 'scoped memory for tpu_custom_call.1']
    #allocation7 [shape = 's32[1]{0}', space=sflag, size = 0x4, scoped, tag = 'scoped memory for tpu_custom_call.1']
    #allocation8 [shape = 'u8[131072]{0}', space=vmem, size = 0x20000, scoped, tag = 'input window, operand 1, single buffered']
    #allocation9 [shape = 's32[1]{0}', space=sflag, size = 0x4, scoped, tag = 'scoped memory for tpu_custom_call.1']
    #allocation10 [shape = 'u8[131072]{0}', space=vmem, size = 0x20000, scoped, tag = 'input window, operand 2, single buffered']
    #allocation11 [shape = 'u8[32768]{0}', space=vmem, size = 0x8000, scoped, tag = 'input window, operand 3, single buffered']
    #allocation12 [shape = 's32[1]{0}', space=sflag, size = 0x4, scoped, tag = 'scoped memory for tpu_custom_call.1']
    #allocation13 [shape = 'u8[4096]{0}', space=vmem, size = 0x1000, scoped, tag = 'output window, operand 0, single buffered']
    %10 = vsyncpa [#allocation6], 0
    %11 = vsyncpa [#allocation9], 0
    %12 = vsyncpa [#allocation12], 0
    %13 = vsyncpa [#allocation7], 0
    // Predicated region
    $region2: #{tpu_custom_call.1} parent=1 // pred_check
      _
    $region3: #{tpu_custom_call.1} parent=1 // pred_check_branch
      %15 = sbr.rel (0) target = $region5
    $region4: #{tpu_custom_call.1} parent=1 // pred_region
      %s17 = ssub.s32 512, 512
      %18 = vsyncadd [#allocation6], %s17
      %s19 = sshll.u32 [#allocation5], 4
      %s20 = int_to_ptr.vmem [resolvable:$true] %s19
      %25 = dma.hbm_to_vmem [thread:$0]  %s0, 512, %s20, [#allocation6], 64, 64, 4
    $region5: #{tpu_custom_call.1} parent=1 // pred_fallthru
      _
    // Predicated region
    $region6: #{tpu_custom_call.1} parent=1 // pred_check
      _
    $region7: #{tpu_custom_call.1} parent=1 // pred_check_branch
      %27 = sbr.rel (0) target = $region9
    $region8: #{tpu_custom_call.1} parent=1 // pred_region
      %s29 = ssub.s32 4096, 4096
      %30 = vsyncadd [#allocation9], %s29
      %s31 = sshll.u32 [#allocation8], 4
      %s32 = int_to_ptr.vmem [resolvable:$true] %s31
      %37 = dma.hbm_to_vmem [thread:$0]  %s1, 4096, %s32, [#allocation9], 256, 256, 16
    $region9: #{tpu_custom_call.1} parent=1 // pred_fallthru
      _
    // Predicated region
    $region10: #{tpu_custom_call.1} parent=1 // pred_check
      _
    $region11: #{tpu_custom_call.1} parent=1 // pred_check_branch
      %39 = sbr.rel (0) target = $region13
    $region12: #{tpu_custom_call.1} parent=1 // pred_region
      %s41 = ssub.s32 4096, 4096
      %42 = vsyncadd [#allocation9], %s41
      %s43 = sshll.u32 [#allocation10], 4
      %s44 = int_to_ptr.vmem [resolvable:$true] %s43
      %49 = dma.hbm_to_vmem [thread:$0]  %s2, 4096, %s44, [#allocation9], 256, 256, 16
    $region13: #{tpu_custom_call.1} parent=1 // pred_fallthru
      _
    // Predicated region
    $region14: #{tpu_custom_call.1} parent=1 // pred_check
      _
    $region15: #{tpu_custom_call.1} parent=1 // pred_check_branch
      %51 = sbr.rel (0) target = $region17
    $region16: #{tpu_custom_call.1} parent=1 // pred_region
      %s53 = ssub.s32 1024, 1024
      %54 = vsyncadd [#allocation12], %s53
      %s55 = sshll.u32 [#allocation11], 4
      %s56 = int_to_ptr.vmem [resolvable:$true] %s55
      %61 = dma.hbm_to_vmem [thread:$0]  %s3, 1024, %s56, [#allocation12], 64, 64, 4
    $region17: #{tpu_custom_call.1} parent=1 // pred_fallthru
      _
    // Predicated region
    $region18: #{tpu_custom_call.1} parent=1 // pred_check
      _
    $region19: #{tpu_custom_call.1} parent=1 // pred_check_branch
      %63 = sbr.rel (0) target = $region21
    $region20: #{tpu_custom_call.1} parent=1 // pred_region
      _
    $region21: #{tpu_custom_call.1} parent=1 // pred_fallthru
      _
    // Predicated region
    $region22: #{tpu_custom_call.1} parent=1 // pred_check
      _
    $region23: #{tpu_custom_call.1} parent=1 // pred_check_branch
      %65 = sbr.rel (0) target = $region25
    $region24: #{tpu_custom_call.1} parent=1 // pred_region
      %66 = dma.done [#allocation6], 512
    $region25: #{tpu_custom_call.1} parent=1 // pred_fallthru
      _
    // Predicated region
    $region26: #{tpu_custom_call.1} parent=1 // pred_check
      _
    $region27: #{tpu_custom_call.1} parent=1 // pred_check_branch
      %68 = sbr.rel (0) target = $region29
    $region28: #{tpu_custom_call.1} parent=1 // pred_region
      %69 = dma.done [#allocation9], 4096
    $region29: #{tpu_custom_call.1} parent=1 // pred_fallthru
      _
    // Predicated region
    $region30: #{tpu_custom_call.1} parent=1 // pred_check
      _
    $region31: #{tpu_custom_call.1} parent=1 // pred_check_branch
      %71 = sbr.rel (0) target = $region33
    $region32: #{tpu_custom_call.1} parent=1 // pred_region
      %72 = dma.done [#allocation9], 4096
    $region33: #{tpu_custom_call.1} parent=1 // pred_fallthru
      _
    // Predicated region
    $region34: #{tpu_custom_call.1} parent=1 // pred_check
      _
    $region35: #{tpu_custom_call.1} parent=1 // pred_check_branch
      %74 = sbr.rel (0) target = $region37
    $region36: #{tpu_custom_call.1} parent=1 // pred_region
      %75 = dma.done [#allocation12], 1024
    $region37: #{tpu_custom_call.1} parent=1 // pred_fallthru
      _
    %p77 = scmp.eq.s32.totalorder 0, 0
    // Predicated region
    $region38: #{tpu_custom_call.1} parent=1 // pred_check
      %p78 = pneg %p77
    $region39: #{tpu_custom_call.1} parent=1 // pred_check_branch
      %80 = sbr.rel (%p78) target = $region41
    $region40: #{tpu_custom_call.1} parent=1 // pred_region
      %81 = vst [vmem:[#allocation3] sm:$0xff] 0.0
      %82 = vst [vmem:[#allocation4] sm:$0xff] 0.0
    $region41: #{tpu_custom_call.1} parent=1 // pred_fallthru
      _
    %v83 = vld [vmem:[#allocation5] sm:$0xf]
    %v84 = vld [vmem:[#allocation5 + $0x4] sm:$0xf]
    %v85 = vld [vmem:[#allocation5 + $0x8] sm:$0xf]
    %v86 = vld [vmem:[#allocation5 + $0xc] sm:$0xf]
    %v87 = vld [vmem:[#allocation5 + $0x10] sm:$0xf]
    %v88 = vld [vmem:[#allocation5 + $0x14] sm:$0xf]
    %v89 = vld [vmem:[#allocation5 + $0x18] sm:$0xf]
    %v90 = vld [vmem:[#allocation5 + $0x1c] sm:$0xf]
    %v91 = vld [vmem:[#allocation8] sm:$0xff]
    %v92 = vld [vmem:[#allocation8 + $0x8] sm:$0xff]
    %v93 = vld [vmem:[#allocation8 + $0x10] sm:$0xff]
    %v94 = vld [vmem:[#allocation8 + $0x18] sm:$0xff]
    %v95 = vld [vmem:[#allocation8 + $0x20] sm:$0xff]
    %v96 = vld [vmem:[#allocation8 + $0x28] sm:$0xff]
    %v97 = vld [vmem:[#allocation8 + $0x30] sm:$0xff]
    %v98 = vld [vmem:[#allocation8 + $0x38] sm:$0xff]
    %v99 = vld [vmem:[#allocation8 + $0x40] sm:$0xff]
    %v100 = vld [vmem:[#allocation8 + $0x48] sm:$0xff]
    %v101 = vld [vmem:[#allocation8 + $0x50] sm:$0xff]
    %v102 = vld [vmem:[#allocation8 + $0x58] sm:$0xff]
    %v103 = vld [vmem:[#allocation8 + $0x60] sm:$0xff]
    %v104 = vld [vmem:[#allocation8 + $0x68] sm:$0xff]
    %v105 = vld [vmem:[#allocation8 + $0x70] sm:$0xff]
    %v106 = vld [vmem:[#allocation8 + $0x78] sm:$0xff]
    %v107 = vld [vmem:[#allocation8 + $0x80] sm:$0xff]
    %v108 = vld [vmem:[#allocation8 + $0x88] sm:$0xff]
    %v109 = vld [vmem:[#allocation8 + $0x90] sm:$0xff]
    %v110 = vld [vmem:[#allocation8 + $0x98] sm:$0xff]
    %v111 = vld [vmem:[#allocation8 + $0xa0] sm:$0xff]
    %v112 = vld [vmem:[#allocation8 + $0xa8] sm:$0xff]
    %v113 = vld [vmem:[#allocation8 + $0xb0] sm:$0xff]
    %v114 = vld [vmem:[#allocation8 + $0xb8] sm:$0xff]
    %v115 = vld [vmem:[#allocation8 + $0xc0] sm:$0xff]
    %v116 = vld [vmem:[#allocation8 + $0xc8] sm:$0xff]
    %v117 = vld [vmem:[#allocation8 + $0xd0] sm:$0xff]
    %v118 = vld [vmem:[#allocation8 + $0xd8] sm:$0xff]
    %v119 = vld [vmem:[#allocation8 + $0xe0] sm:$0xff]
    %v120 = vld [vmem:[#allocation8 + $0xe8] sm:$0xff]
    %v121 = vld [vmem:[#allocation8 + $0xf0] sm:$0xff]
    %v122 = vld [vmem:[#allocation8 + $0xf8] sm:$0xff]
    %v131 = vunpack.c.l.b16 %v83
    %v132 = vunpack.c.l.b16 %v84
    %v133 = vunpack.c.l.b16 %v85
    %v134 = vunpack.c.l.b16 %v86
    %v135 = vunpack.c.l.b16 %v87
    %v136 = vunpack.c.l.b16 %v88
    %v137 = vunpack.c.l.b16 %v89
    %v138 = vunpack.c.l.b16 %v90
    %v139 = vpack.c.b16 %v132, %v131
    %v140 = vpack.c.b16 %v134, %v133
    %v141 = vpack.c.b16 %v136, %v135
    %v142 = vpack.c.b16 %v138, %v137
    %v179 = vunpack.c.l.b16 %v91
    %v180 = vunpack.c.h.b16 %v91
    %v181 = vunpack.c.l.b16 %v92
    %v182 = vunpack.c.h.b16 %v92
    %v183 = vunpack.c.l.b16 %v93
    %v184 = vunpack.c.h.b16 %v93
    %v185 = vunpack.c.l.b16 %v94
    %v186 = vunpack.c.h.b16 %v94
    %v187 = vunpack.c.l.b16 %v95
    %v188 = vunpack.c.h.b16 %v95
    %v189 = vunpack.c.l.b16 %v96
    %v190 = vunpack.c.h.b16 %v96
    %v191 = vunpack.c.l.b16 %v97
    %v192 = vunpack.c.h.b16 %v97
    %v193 = vunpack.c.l.b16 %v98
    %v194 = vunpack.c.h.b16 %v98
    %v195 = vunpack.c.l.b16 %v99
    %v196 = vunpack.c.h.b16 %v99
    %v197 = vunpack.c.l.b16 %v100
    %v198 = vunpack.c.h.b16 %v100
    %v199 = vunpack.c.l.b16 %v101
    %v200 = vunpack.c.h.b16 %v101
    %v201 = vunpack.c.l.b16 %v102
    %v202 = vunpack.c.h.b16 %v102
    %v203 = vunpack.c.l.b16 %v103
    %v204 = vunpack.c.h.b16 %v103
    %v205 = vunpack.c.l.b16 %v104
    %v206 = vunpack.c.h.b16 %v104
    %v207 = vunpack.c.l.b16 %v105
    %v208 = vunpack.c.h.b16 %v105
    %v209 = vunpack.c.l.b16 %v106
    %v210 = vunpack.c.h.b16 %v106
    %v211 = vunpack.c.l.b16 %v107
    %v212 = vunpack.c.h.b16 %v107
    %v213 = vunpack.c.l.b16 %v108
    %v214 = vunpack.c.h.b16 %v108
    %v215 = vunpack.c.l.b16 %v109
    %v216 = vunpack.c.h.b16 %v109
    %v217 = vunpack.c.l.b16 %v110
    %v218 = vunpack.c.h.b16 %v110
    %v219 = vunpack.c.l.b16 %v111
    %v220 = vunpack.c.h.b16 %v111
    %v221 = vunpack.c.l.b16 %v112
    %v222 = vunpack.c.h.b16 %v112
    %v223 = vunpack.c.l.b16 %v113
    %v224 = vunpack.c.h.b16 %v113
    %v225 = vunpack.c.l.b16 %v114
    %v226 = vunpack.c.h.b16 %v114
    %v227 = vunpack.c.l.b16 %v115
    %v228 = vunpack.c.h.b16 %v115
    %v229 = vunpack.c.l.b16 %v116
    %v230 = vunpack.c.h.b16 %v116
    %v231 = vunpack.c.l.b16 %v117
    %v232 = vunpack.c.h.b16 %v117
    %v233 = vunpack.c.l.b16 %v118
    %v234 = vunpack.c.h.b16 %v118
    %v235 = vunpack.c.l.b16 %v119
    %v236 = vunpack.c.h.b16 %v119
    %v237 = vunpack.c.l.b16 %v120
    %v238 = vunpack.c.h.b16 %v120
    %v239 = vunpack.c.l.b16 %v121
    %v240 = vunpack.c.h.b16 %v121
    %v241 = vunpack.c.l.b16 %v122
    %v242 = vunpack.c.h.b16 %v122
    %v243 = vpack.c.b16 %v183, %v179
    %v244 = vpack.c.b16 %v184, %v180
    %v245 = vpack.c.b16 %v185, %v181
    %v246 = vpack.c.b16 %v186, %v182
    %v247 = vpack.c.b16 %v191, %v187
    %v248 = vpack.c.b16 %v192, %v188
    %v249 = vpack.c.b16 %v193, %v189
    %v250 = vpack.c.b16 %v194, %v190
    %v251 = vpack.c.b16 %v199, %v195
    %v252 = vpack.c.b16 %v200, %v196
    %v253 = vpack.c.b16 %v201, %v197
    %v254 = vpack.c.b16 %v202, %v198
    %v255 = vpack.c.b16 %v207, %v203
    %v256 = vpack.c.b16 %v208, %v204
    %v257 = vpack.c.b16 %v209, %v205
    %v258 = vpack.c.b16 %v210, %v206
    %v259 = vpack.c.b16 %v215, %v211
    %v260 = vpack.c.b16 %v216, %v212
    %v261 = vpack.c.b16 %v217, %v213
    %v262 = vpack.c.b16 %v218, %v214
    %v263 = vpack.c.b16 %v223, %v219
    %v264 = vpack.c.b16 %v224, %v220
    %v265 = vpack.c.b16 %v225, %v221
    %v266 = vpack.c.b16 %v226, %v222
    %v267 = vpack.c.b16 %v231, %v227
    %v268 = vpack.c.b16 %v232, %v228
    %v269 = vpack.c.b16 %v233, %v229
    %v270 = vpack.c.b16 %v234, %v230
    %v271 = vpack.c.b16 %v239, %v235
    %v272 = vpack.c.b16 %v240, %v236
    %v273 = vpack.c.b16 %v241, %v237
    %v274 = vpack.c.b16 %v242, %v238
    %307 = vmatprep.subr.bf16.mxu0 %v244
    %308 = vmatpush1.bf16.msra.mxu0 %v243
    %309 = vmatprep.subr.bf16.mxu0 %v248
    %310 = vmatpush1.bf16.msra.mxu0 %v247
    %311 = vmatprep.subr.bf16.mxu0 %v252
    %312 = vmatpush1.bf16.msra.mxu0 %v251
    %313 = vmatprep.subr.bf16.mxu0 %v256
    %314 = vmatpush1.bf16.msra.mxu0 %v255
    %315 = vmatprep.subr.bf16.mxu0 %v260
    %316 = vmatpush1.bf16.msra.mxu0 %v259
    %317 = vmatprep.subr.bf16.mxu0 %v264
    %318 = vmatpush1.bf16.msra.mxu0 %v263
    %319 = vmatprep.subr.bf16.mxu0 %v268
    %320 = vmatpush1.bf16.msra.mxu0 %v267
    %321 = vmatprep.subr.bf16.mxu0 %v272
    %322 = vmatpush1.bf16.msra.mxu0 %v271
    %323 = vmatprep.subr.bf16.mxu0 0
    %324 = vmatpush1.bf16.msra.mxu0 0
    %325 = vmatprep.subr.bf16.mxu0 0
    %326 = vmatpush1.bf16.msra.mxu0 0
    %327 = vmatprep.subr.bf16.mxu0 0
    %328 = vmatpush1.bf16.msra.mxu0 0
    %329 = vmatprep.subr.bf16.mxu0 0
    %330 = vmatpush1.bf16.msra.mxu0 0
    %331 = vmatprep.subr.bf16.mxu0 0
    %332 = vmatpush1.bf16.msra.mxu0 0
    %333 = vmatprep.subr.bf16.mxu0 0
    %334 = vmatpush1.bf16.msra.mxu0 0
    %335 = vmatprep.subr.bf16.mxu0 0
    %336 = vmatpush1.bf16.msra.mxu0 0
    %337 = vmatprep.subr.bf16.mxu0 0
    %338 = vmatpush1.bf16.msra.mxu0 0
    %339 = vmatprep.mubr.bf16.mxu0 0
    %340 = vmatmul.mubr.bf16.gmra.mrb[0].mxu0 %v139
    %v341 = vpop.f32.mrb[0].mxu0
    %v342 = vadd.f32 0.0, %v341
    %v343 = vpop.f32.mrb[0].mxu0
    %v344 = vadd.f32 0.0, %v343
    %v345 = vpop.f32.mrb[0].mxu0
    %v346 = vadd.f32 0.0, %v345
    %v347 = vpop.f32.mrb[0].mxu0
    %v348 = vadd.f32 0.0, %v347
    %349 = vmatprep.mubr.bf16.mxu0 0
    %350 = vmatmul.mubr.bf16.gmra.mrb[0].mxu0 %v140
    %v351 = vpop.f32.mrb[0].mxu0
    %v352 = vadd.f32 0.0, %v351
    %v353 = vpop.f32.mrb[0].mxu0
    %v354 = vadd.f32 0.0, %v353
    %v355 = vpop.f32.mrb[0].mxu0
    %v356 = vadd.f32 0.0, %v355
    %v357 = vpop.f32.mrb[0].mxu0
    %v358 = vadd.f32 0.0, %v357
    %359 = vmatprep.mubr.bf16.mxu0 0
    %360 = vmatmul.mubr.bf16.gmra.mrb[0].mxu0 %v141
    %v361 = vpop.f32.mrb[0].mxu0
    %v362 = vadd.f32 0.0, %v361
    %v363 = vpop.f32.mrb[0].mxu0
    %v364 = vadd.f32 0.0, %v363
    %v365 = vpop.f32.mrb[0].mxu0
    %v366 = vadd.f32 0.0, %v365
    %v367 = vpop.f32.mrb[0].mxu0
    %v368 = vadd.f32 0.0, %v367
    %369 = vmatprep.mubr.bf16.mxu0 0
    %370 = vmatmul.mubr.bf16.gmra.mrb[0].mxu0 %v142
    %v371 = vpop.f32.mrb[0].mxu0
    %v372 = vadd.f32 0.0, %v371
    %v373 = vpop.f32.mrb[0].mxu0
    %v374 = vadd.f32 0.0, %v373
    %v375 = vpop.f32.mrb[0].mxu0
    %v376 = vadd.f32 0.0, %v375
    %v377 = vpop.f32.mrb[0].mxu0
    %v378 = vadd.f32 0.0, %v377
    %379 = vdwg.mxu0
    %380 = vmatprep.subr.bf16.mxu0 %v246
    %381 = vmatpush1.bf16.msra.mxu0 %v245
    %382 = vmatprep.subr.bf16.mxu0 %v250
    %383 = vmatpush1.bf16.msra.mxu0 %v249
    %384 = vmatprep.subr.bf16.mxu0 %v254
    %385 = vmatpush1.bf16.msra.mxu0 %v253
    %386 = vmatprep.subr.bf16.mxu0 %v258
    %387 = vmatpush1.bf16.msra.mxu0 %v257
    %388 = vmatprep.subr.bf16.mxu0 %v262
    %389 = vmatpush1.bf16.msra.mxu0 %v261
    %390 = vmatprep.subr.bf16.mxu0 %v266
    %391 = vmatpush1.bf16.msra.mxu0 %v265
    %392 = vmatprep.subr.bf16.mxu0 %v270
    %393 = vmatpush1.bf16.msra.mxu0 %v269
    %394 = vmatprep.subr.bf16.mxu0 %v274
    %395 = vmatpush1.bf16.msra.mxu0 %v273
    %396 = vmatprep.subr.bf16.mxu0 0
    %397 = vmatpush1.bf16.msra.mxu0 0
    %398 = vmatprep.subr.bf16.mxu0 0
    %399 = vmatpush1.bf16.msra.mxu0 0
    %400 = vmatprep.subr.bf16.mxu0 0
    %401 = vmatpush1.bf16.msra.mxu0 0
    %402 = vmatprep.subr.bf16.mxu0 0
    %403 = vmatpush1.bf16.msra.mxu0 0
    %404 = vmatprep.subr.bf16.mxu0 0
    %405 = vmatpush1.bf16.msra.mxu0 0
    %406 = vmatprep.subr.bf16.mxu0 0
    %407 = vmatpush1.bf16.msra.mxu0 0
    %408 = vmatprep.subr.bf16.mxu0 0
    %409 = vmatpush1.bf16.msra.mxu0 0
    %410 = vmatprep.subr.bf16.mxu0 0
    %411 = vmatpush1.bf16.msra.mxu0 0
    %412 = vmatprep.mubr.bf16.mxu0 0
    %413 = vmatmul.mubr.bf16.gmra.mrb[0].mxu0 %v139
    %v414 = vpop.f32.mrb[0].mxu0
    %v415 = vadd.f32 0.0, %v414
    %v416 = vpop.f32.mrb[0].mxu0
    %v417 = vadd.f32 0.0, %v416
    %v418 = vpop.f32.mrb[0].mxu0
    %v419 = vadd.f32 0.0, %v418
    %v420 = vpop.f32.mrb[0].mxu0
    %v421 = vadd.f32 0.0, %v420
    %422 = vmatprep.mubr.bf16.mxu0 0
    %423 = vmatmul.mubr.bf16.gmra.mrb[0].mxu0 %v140
    %v424 = vpop.f32.mrb[0].mxu0
    %v425 = vadd.f32 0.0, %v424
    %v426 = vpop.f32.mrb[0].mxu0
    %v427 = vadd.f32 0.0, %v426
    %v428 = vpop.f32.mrb[0].mxu0
    %v429 = vadd.f32 0.0, %v428
    %v430 = vpop.f32.mrb[0].mxu0
    %v431 = vadd.f32 0.0, %v430
    %432 = vmatprep.mubr.bf16.mxu0 0
    %433 = vmatmul.mubr.bf16.gmra.mrb[0].mxu0 %v141
    %v434 = vpop.f32.mrb[0].mxu0
    %v435 = vadd.f32 0.0, %v434
    %v436 = vpop.f32.mrb[0].mxu0
    %v437 = vadd.f32 0.0, %v436
    %v438 = vpop.f32.mrb[0].mxu0
    %v439 = vadd.f32 0.0, %v438
    %v440 = vpop.f32.mrb[0].mxu0
    %v441 = vadd.f32 0.0, %v440
    %442 = vmatprep.mubr.bf16.mxu0 0
    %443 = vmatmul.mubr.bf16.gmra.mrb[0].mxu0 %v142
    %v444 = vpop.f32.mrb[0].mxu0
    %v445 = vadd.f32 0.0, %v444
    %v446 = vpop.f32.mrb[0].mxu0
    %v447 = vadd.f32 0.0, %v446
    %v448 = vpop.f32.mrb[0].mxu0
    %v449 = vadd.f32 0.0, %v448
    %v450 = vpop.f32.mrb[0].mxu0
    %v451 = vadd.f32 0.0, %v450
    %452 = vdwg.mxu0
    %453 = vst [vmem:[#allocation2] sm:$0xff] %v342
    %454 = vst [vmem:[#allocation2 + $0x8] sm:$0xff] %v344
    %455 = vst [vmem:[#allocation2 + $0x10] sm:$0xff] %v415
    %456 = vst [vmem:[#allocation2 + $0x18] sm:$0xff] %v417
    %457 = vst [vmem:[#allocation2 + $0x20] sm:$0xff] %v346
    %458 = vst [vmem:[#allocation2 + $0x28] sm:$0xff] %v348
    %459 = vst [vmem:[#allocation2 + $0x30] sm:$0xff] %v419
    %460 = vst [vmem:[#allocation2 + $0x38] sm:$0xff] %v421
    %461 = vst [vmem:[#allocation2 + $0x40] sm:$0xff] %v352
    %462 = vst [vmem:[#allocation2 + $0x48] sm:$0xff] %v354
    %463 = vst [vmem:[#allocation2 + $0x50] sm:$0xff] %v425
    %464 = vst [vmem:[#allocation2 + $0x58] sm:$0xff] %v427
    %465 = vst [vmem:[#allocation2 + $0x60] sm:$0xff] %v356
    %466 = vst [vmem:[#allocation2 + $0x68] sm:$0xff] %v358
    %467 = vst [vmem:[#allocation2 + $0x70] sm:$0xff] %v429
    %468 = vst [vmem:[#allocation2 + $0x78] sm:$0xff] %v431
    %469 = vst [vmem:[#allocation2 + $0x80] sm:$0xff] %v362
    %470 = vst [vmem:[#allocation2 + $0x88] sm:$0xff] %v364
    %471 = vst [vmem:[#allocation2 + $0x90] sm:$0xff] %v435
    %472 = vst [vmem:[#allocation2 + $0x98] sm:$0xff] %v437
    %473 = vst [vmem:[#allocation2 + $0xa0] sm:$0xff] %v366
    %474 = vst [vmem:[#allocation2 + $0xa8] sm:$0xff] %v368
    %475 = vst [vmem:[#allocation2 + $0xb0] sm:$0xff] %v439
    %476 = vst [vmem:[#allocation2 + $0xb8] sm:$0xff] %v441
    %477 = vst [vmem:[#allocation2 + $0xc0] sm:$0xff] %v372
    %478 = vst [vmem:[#allocation2 + $0xc8] sm:$0xff] %v374
    %479 = vst [vmem:[#allocation2 + $0xd0] sm:$0xff] %v445
    %480 = vst [vmem:[#allocation2 + $0xd8] sm:$0xff] %v447
    %481 = vst [vmem:[#allocation2 + $0xe0] sm:$0xff] %v376
    %482 = vst [vmem:[#allocation2 + $0xe8] sm:$0xff] %v378
    %483 = vst [vmem:[#allocation2 + $0xf0] sm:$0xff] %v449
    %484 = vst [vmem:[#allocation2 + $0xf8] sm:$0xff] %v451
    %v485 = vld [vmem:[#allocation10] sm:$0xff]
    %v486 = vld [vmem:[#allocation10 + $0x8] sm:$0xff]
    %v487 = vld [vmem:[#allocation10 + $0x10] sm:$0xff]
    %v488 = vld [vmem:[#allocation10 + $0x18] sm:$0xff]
    %v489 = vld [vmem:[#allocation10 + $0x20] sm:$0xff]
    %v490 = vld [vmem:[#allocation10 + $0x28] sm:$0xff]
    %v491 = vld [vmem:[#allocation10 + $0x30] sm:$0xff]
    %v492 = vld [vmem:[#allocation10 + $0x38] sm:$0xff]
    %v493 = vld [vmem:[#allocation10 + $0x40] sm:$0xff]
    %v494 = vld [vmem:[#allocation10 + $0x48] sm:$0xff]
    %v495 = vld [vmem:[#allocation10 + $0x50] sm:$0xff]
    %v496 = vld [vmem:[#allocation10 + $0x58] sm:$0xff]
    %v497 = vld [vmem:[#allocation10 + $0x60] sm:$0xff]
    %v498 = vld [vmem:[#allocation10 + $0x68] sm:$0xff]
    %v499 = vld [vmem:[#allocation10 + $0x70] sm:$0xff]
    %v500 = vld [vmem:[#allocation10 + $0x78] sm:$0xff]
    %v501 = vld [vmem:[#allocation10 + $0x80] sm:$0xff]
    %v502 = vld [vmem:[#allocation10 + $0x88] sm:$0xff]
    %v503 = vld [vmem:[#allocation10 + $0x90] sm:$0xff]
    %v504 = vld [vmem:[#allocation10 + $0x98] sm:$0xff]
    %v505 = vld [vmem:[#allocation10 + $0xa0] sm:$0xff]
    %v506 = vld [vmem:[#allocation10 + $0xa8] sm:$0xff]
    %v507 = vld [vmem:[#allocation10 + $0xb0] sm:$0xff]
    %v508 = vld [vmem:[#allocation10 + $0xb8] sm:$0xff]
    %v509 = vld [vmem:[#allocation10 + $0xc0] sm:$0xff]
    %v510 = vld [vmem:[#allocation10 + $0xc8] sm:$0xff]
    %v511 = vld [vmem:[#allocation10 + $0xd0] sm:$0xff]
    %v512 = vld [vmem:[#allocation10 + $0xd8] sm:$0xff]
    %v513 = vld [vmem:[#allocation10 + $0xe0] sm:$0xff]
    %v514 = vld [vmem:[#allocation10 + $0xe8] sm:$0xff]
    %v515 = vld [vmem:[#allocation10 + $0xf0] sm:$0xff]
    %v516 = vld [vmem:[#allocation10 + $0xf8] sm:$0xff]
    %v517 = vld [vmem:[#allocation3] sm:$0xff]
    %v518 = vld [vmem:[#allocation4] sm:$0xff]
    %s519 = smul.u32 0, 4
    %s520 = smul.addr %s519, 8
    %s521 = scalar_lea.vmem [#allocation2], %s520
    %v522 = vld [vmem:[%s521] sm:$0xff]
    %v523 = vld [vmem:[%s521 + $0x8] sm:$0xff]
    %v524 = vld [vmem:[%s521 + $0x10] sm:$0xff]
    %v525 = vld [vmem:[%s521 + $0x18] sm:$0xff]
    %v526 = vpack.c.bf16 %v517, %v517
    %v559 = vunpack.c.l.b16 %v485
    %v560 = vunpack.c.h.b16 %v485
    %v561 = vunpack.c.l.b16 %v486
    %v562 = vunpack.c.h.b16 %v486
    %v563 = vunpack.c.l.b16 %v487
    %v564 = vunpack.c.h.b16 %v487
    %v565 = vunpack.c.l.b16 %v488
    %v566 = vunpack.c.h.b16 %v488
    %v567 = vunpack.c.l.b16 %v489
    %v568 = vunpack.c.h.b16 %v489
    %v569 = vunpack.c.l.b16 %v490
    %v570 = vunpack.c.h.b16 %v490
    %v571 = vunpack.c.l.b16 %v491
    %v572 = vunpack.c.h.b16 %v491
    %v573 = vunpack.c.l.b16 %v492
    %v574 = vunpack.c.h.b16 %v492
    %v575 = vunpack.c.l.b16 %v493
    %v576 = vunpack.c.h.b16 %v493
    %v577 = vunpack.c.l.b16 %v494
    %v578 = vunpack.c.h.b16 %v494
    %v579 = vunpack.c.l.b16 %v495
    %v580 = vunpack.c.h.b16 %v495
    %v581 = vunpack.c.l.b16 %v496
    %v582 = vunpack.c.h.b16 %v496
    %v583 = vunpack.c.l.b16 %v497
    %v584 = vunpack.c.h.b16 %v497
    %v585 = vunpack.c.l.b16 %v498
    %v586 = vunpack.c.h.b16 %v498
    %v587 = vunpack.c.l.b16 %v499
    %v588 = vunpack.c.h.b16 %v499
    %v589 = vunpack.c.l.b16 %v500
    %v590 = vunpack.c.h.b16 %v500
    %v591 = vunpack.c.l.b16 %v501
    %v592 = vunpack.c.h.b16 %v501
    %v593 = vunpack.c.l.b16 %v502
    %v594 = vunpack.c.h.b16 %v502
    %v595 = vunpack.c.l.b16 %v503
    %v596 = vunpack.c.h.b16 %v503
    %v597 = vunpack.c.l.b16 %v504
    %v598 = vunpack.c.h.b16 %v504
    %v599 = vunpack.c.l.b16 %v505
    %v600 = vunpack.c.h.b16 %v505
    %v601 = vunpack.c.l.b16 %v506
    %v602 = vunpack.c.h.b16 %v506
    %v603 = vunpack.c.l.b16 %v507
    %v604 = vunpack.c.h.b16 %v507
    %v605 = vunpack.c.l.b16 %v508
    %v606 = vunpack.c.h.b16 %v508
    %v607 = vunpack.c.l.b16 %v509
    %v608 = vunpack.c.h.b16 %v509
    %v609 = vunpack.c.l.b16 %v510
    %v610 = vunpack.c.h.b16 %v510
    %v611 = vunpack.c.l.b16 %v511
    %v612 = vunpack.c.h.b16 %v511
    %v613 = vunpack.c.l.b16 %v512
    %v614 = vunpack.c.h.b16 %v512
    %v615 = vunpack.c.l.b16 %v513
    %v616 = vunpack.c.h.b16 %v513
    %v617 = vunpack.c.l.b16 %v514
    %v618 = vunpack.c.h.b16 %v514
    %v619 = vunpack.c.l.b16 %v515
    %v620 = vunpack.c.h.b16 %v515
    %v621 = vunpack.c.l.b16 %v516
    %v622 = vunpack.c.h.b16 %v516
    %v623 = vpack.c.b16 %v563, %v559
    %v624 = vpack.c.b16 %v564, %v560
    %v625 = vpack.c.b16 %v565, %v561
    %v626 = vpack.c.b16 %v566, %v562
    %v627 = vpack.c.b16 %v571, %v567
    %v628 = vpack.c.b16 %v572, %v568
    %v629 = vpack.c.b16 %v573, %v569
    %v630 = vpack.c.b16 %v574, %v570
    %v631 = vpack.c.b16 %v579, %v575
    %v632 = vpack.c.b16 %v580, %v576
    %v633 = vpack.c.b16 %v581, %v577
    %v634 = vpack.c.b16 %v582, %v578
    %v635 = vpack.c.b16 %v587, %v583
    %v636 = vpack.c.b16 %v588, %v584
    %v637 = vpack.c.b16 %v589, %v585
    %v638 = vpack.c.b16 %v590, %v586
    %v639 = vpack.c.b16 %v595, %v591
    %v640 = vpack.c.b16 %v596, %v592
    %v641 = vpack.c.b16 %v597, %v593
    %v642 = vpack.c.b16 %v598, %v594
    %v643 = vpack.c.b16 %v603, %v599
    %v644 = vpack.c.b16 %v604, %v600
    %v645 = vpack.c.b16 %v605, %v601
    %v646 = vpack.c.b16 %v606, %v602
    %v647 = vpack.c.b16 %v611, %v607
    %v648 = vpack.c.b16 %v612, %v608
    %v649 = vpack.c.b16 %v613, %v609
    %v650 = vpack.c.b16 %v614, %v610
    %v651 = vpack.c.b16 %v619, %v615
    %v652 = vpack.c.b16 %v620, %v616
    %v653 = vpack.c.b16 %v621, %v617
    %v654 = vpack.c.b16 %v622, %v618
    %687 = vmatprep.subr.bf16.mxu0 %v624
    %688 = vmatpush1.bf16.msra.mxu0 %v623
    %689 = vmatprep.subr.bf16.mxu0 %v628
    %690 = vmatpush1.bf16.msra.mxu0 %v627
    %691 = vmatprep.subr.bf16.mxu0 %v632
    %692 = vmatpush1.bf16.msra.mxu0 %v631
    %693 = vmatprep.subr.bf16.mxu0 %v636
    %694 = vmatpush1.bf16.msra.mxu0 %v635
    %695 = vmatprep.subr.bf16.mxu0 %v640
    %696 = vmatpush1.bf16.msra.mxu0 %v639
    %697 = vmatprep.subr.bf16.mxu0 %v644
    %698 = vmatpush1.bf16.msra.mxu0 %v643
    %699 = vmatprep.subr.bf16.mxu0 %v648
    %700 = vmatpush1.bf16.msra.mxu0 %v647
    %701 = vmatprep.subr.bf16.mxu0 %v652
    %702 = vmatpush1.bf16.msra.mxu0 %v651
    %703 = vmatprep.subr.bf16.mxu0 0
    %704 = vmatpush1.bf16.msra.mxu0 0
    %705 = vmatprep.subr.bf16.mxu0 0
    %706 = vmatpush1.bf16.msra.mxu0 0
    %707 = vmatprep.subr.bf16.mxu0 0
    %708 = vmatpush1.bf16.msra.mxu0 0
    %709 = vmatprep.subr.bf16.mxu0 0
    %710 = vmatpush1.bf16.msra.mxu0 0
    %711 = vmatprep.subr.bf16.mxu0 0
    %712 = vmatpush1.bf16.msra.mxu0 0
    %713 = vmatprep.subr.bf16.mxu0 0
    %714 = vmatpush1.bf16.msra.mxu0 0
    %715 = vmatprep.subr.bf16.mxu0 0
    %716 = vmatpush1.bf16.msra.mxu0 0
    %717 = vmatprep.subr.bf16.mxu0 0
    %718 = vmatpush1.bf16.msra.mxu0 0
    %719 = vmatprep.mubr.bf16.mxu0 0
    %720 = vmatmul.mubr.bf16.gmra.mrb[0].mxu0 %v526
    %v721 = vpop.f32.mrb[0].mxu0
    %v722 = vadd.f32 0.0, %v721
    %v723 = vpop.f32.mrb[0].mxu0
    %v724 = vadd.f32 0.0, %v723
    %v725 = vpop.f32.mrb[0].mxu0
    %v726 = vpop.f32.mrb[0].mxu0
    %727 = vdwg.mxu0
    %728 = vmatprep.subr.bf16.mxu0 %v626
    %729 = vmatpush1.bf16.msra.mxu0 %v625
    %730 = vmatprep.subr.bf16.mxu0 %v630
    %731 = vmatpush1.bf16.msra.mxu0 %v629
    %732 = vmatprep.subr.bf16.mxu0 %v634
    %733 = vmatpush1.bf16.msra.mxu0 %v633
    %734 = vmatprep.subr.bf16.mxu0 %v638
    %735 = vmatpush1.bf16.msra.mxu0 %v637
    %736 = vmatprep.subr.bf16.mxu0 %v642
    %737 = vmatpush1.bf16.msra.mxu0 %v641
    %738 = vmatprep.subr.bf16.mxu0 %v646
    %739 = vmatpush1.bf16.msra.mxu0 %v645
    %740 = vmatprep.subr.bf16.mxu0 %v650
    %741 = vmatpush1.bf16.msra.mxu0 %v649
    %742 = vmatprep.subr.bf16.mxu0 %v654
    %743 = vmatpush1.bf16.msra.mxu0 %v653
    %744 = vmatprep.subr.bf16.mxu0 0
    %745 = vmatpush1.bf16.msra.mxu0 0
    %746 = vmatprep.subr.bf16.mxu0 0
    %747 = vmatpush1.bf16.msra.mxu0 0
    %748 = vmatprep.subr.bf16.mxu0 0
    %749 = vmatpush1.bf16.msra.mxu0 0
    %750 = vmatprep.subr.bf16.mxu0 0
    %751 = vmatpush1.bf16.msra.mxu0 0
    %752 = vmatprep.subr.bf16.mxu0 0
    %753 = vmatpush1.bf16.msra.mxu0 0
    %754 = vmatprep.subr.bf16.mxu0 0
    %755 = vmatpush1.bf16.msra.mxu0 0
    %756 = vmatprep.subr.bf16.mxu0 0
    %757 = vmatpush1.bf16.msra.mxu0 0
    %758 = vmatprep.subr.bf16.mxu0 0
    %759 = vmatpush1.bf16.msra.mxu0 0
    %760 = vmatprep.mubr.bf16.mxu0 0
    %761 = vmatmul.mubr.bf16.gmra.mrb[0].mxu0 %v526
    %v762 = vpop.f32.mrb[0].mxu0
    %v763 = vadd.f32 0.0, %v762
    %v764 = vpop.f32.mrb[0].mxu0
    %v765 = vadd.f32 0.0, %v764
    %v766 = vpop.f32.mrb[0].mxu0
    %v767 = vpop.f32.mrb[0].mxu0
    %768 = vdwg.mxu0
    %v769 = vadd.f32 %v522, %v722
    %v770 = vadd.f32 %v523, %v724
    %v771 = vadd.f32 %v524, %v763
    %v772 = vadd.f32 %v525, %v765
    %v773 = vxor.u32 %v769, 2147483648
    %v774 = vmul.f32 %v773, 1.442695
    %v775 = vpow.pop %v774
    %v776 = vadd.f32 %v775, 1.0
    %v777 = vrcp.pop %v776
    %v778 = vmul.f32 1.0, %v777
    %v779 = vxor.u32 %v770, 2147483648
    %v780 = vmul.f32 %v779, 1.442695
    %v781 = vpow.pop %v780
    %v782 = vadd.f32 %v781, 1.0
    %v783 = vrcp.pop %v782
    %v784 = vmul.f32 1.0, %v783
    %v785 = vtanh.pop %v771
    %v786 = vxor.u32 %v772, 2147483648
    %v787 = vmul.f32 %v786, 1.442695
    %v788 = vpow.pop %v787
    %v789 = vadd.f32 %v788, 1.0
    %v790 = vrcp.pop %v789
    %v791 = vmul.f32 1.0, %v790
    %v792 = vmul.f32 %v784, %v518
    %v793 = vmul.f32 %v778, %v785
    %v794 = vadd.f32 %v792, %v793
    %v795 = vtanh.pop %v794
    %v796 = vmul.f32 %v791, %v795
    %s797 = smul.u32 1, 4
    %s798 = smul.addr %s797, 8
    %s799 = scalar_lea.vmem [#allocation2], %s798
    %v800 = vld [vmem:[%s799] sm:$0xff]
    %v801 = vld [vmem:[%s799 + $0x8] sm:$0xff]
    %v802 = vld [vmem:[%s799 + $0x10] sm:$0xff]
    %v803 = vld [vmem:[%s799 + $0x18] sm:$0xff]
    %v804 = vpack.c.bf16 %v796, %v796
    %805 = vmatprep.subr.bf16.mxu0 %v624
    %806 = vmatpush1.bf16.msra.mxu0 %v623
    %807 = vmatprep.subr.bf16.mxu0 %v628
    %808 = vmatpush1.bf16.msra.mxu0 %v627
    %809 = vmatprep.subr.bf16.mxu0 %v632
    %810 = vmatpush1.bf16.msra.mxu0 %v631
    %811 = vmatprep.subr.bf16.mxu0 %v636
    %812 = vmatpush1.bf16.msra.mxu0 %v635
    %813 = vmatprep.subr.bf16.mxu0 %v640
    %814 = vmatpush1.bf16.msra.mxu0 %v639
    %815 = vmatprep.subr.bf16.mxu0 %v644
    %816 = vmatpush1.bf16.msra.mxu0 %v643
    %817 = vmatprep.subr.bf16.mxu0 %v648
    %818 = vmatpush1.bf16.msra.mxu0 %v647
    %819 = vmatprep.subr.bf16.mxu0 %v652
    %820 = vmatpush1.bf16.msra.mxu0 %v651
    %821 = vmatprep.subr.bf16.mxu0 0
    %822 = vmatpush1.bf16.msra.mxu0 0
    %823 = vmatprep.subr.bf16.mxu0 0
    %824 = vmatpush1.bf16.msra.mxu0 0
    %825 = vmatprep.subr.bf16.mxu0 0
    %826 = vmatpush1.bf16.msra.mxu0 0
    %827 = vmatprep.subr.bf16.mxu0 0
    %828 = vmatpush1.bf16.msra.mxu0 0
    %829 = vmatprep.subr.bf16.mxu0 0
    %830 = vmatpush1.bf16.msra.mxu0 0
    %831 = vmatprep.subr.bf16.mxu0 0
    %832 = vmatpush1.bf16.msra.mxu0 0
    %833 = vmatprep.subr.bf16.mxu0 0
    %834 = vmatpush1.bf16.msra.mxu0 0
    %835 = vmatprep.subr.bf16.mxu0 0
    %836 = vmatpush1.bf16.msra.mxu0 0
    %837 = vmatprep.mubr.bf16.mxu0 0
    %838 = vmatmul.mubr.bf16.gmra.mrb[0].mxu0 %v804
    %v839 = vpop.f32.mrb[0].mxu0
    %v840 = vadd.f32 0.0, %v839
    %v841 = vpop.f32.mrb[0].mxu0
    %v842 = vadd.f32 0.0, %v841
    %v843 = vpop.f32.mrb[0].mxu0
    %v844 = vpop.f32.mrb[0].mxu0
    %845 = vdwg.mxu0
    %846 = vmatprep.subr.bf16.mxu0 %v626
    %847 = vmatpush1.bf16.msra.mxu0 %v625
    %848 = vmatprep.subr.bf16.mxu0 %v630
    %849 = vmatpush1.bf16.msra.mxu0 %v629
    %850 = vmatprep.subr.bf16.mxu0 %v634
    %851 = vmatpush1.bf16.msra.mxu0 %v633
    %852 = vmatprep.subr.bf16.mxu0 %v638
    %853 = vmatpush1.bf16.msra.mxu0 %v637
    %854 = vmatprep.subr.bf16.mxu0 %v642
    %855 = vmatpush1.bf16.msra.mxu0 %v641
    %856 = vmatprep.subr.bf16.mxu0 %v646
    %857 = vmatpush1.bf16.msra.mxu0 %v645
    %858 = vmatprep.subr.bf16.mxu0 %v650
    %859 = vmatpush1.bf16.msra.mxu0 %v649
    %860 = vmatprep.subr.bf16.mxu0 %v654
    %861 = vmatpush1.bf16.msra.mxu0 %v653
    %862 = vmatprep.subr.bf16.mxu0 0
    %863 = vmatpush1.bf16.msra.mxu0 0
    %864 = vmatprep.subr.bf16.mxu0 0
    %865 = vmatpush1.bf16.msra.mxu0 0
    %866 = vmatprep.subr.bf16.mxu0 0
    %867 = vmatpush1.bf16.msra.mxu0 0
    %868 = vmatprep.subr.bf16.mxu0 0
    %869 = vmatpush1.bf16.msra.mxu0 0
    %870 = vmatprep.subr.bf16.mxu0 0
    %871 = vmatpush1.bf16.msra.mxu0 0
    %872 = vmatprep.subr.bf16.mxu0 0
    %873 = vmatpush1.bf16.msra.mxu0 0
    %874 = vmatprep.subr.bf16.mxu0 0
    %875 = vmatpush1.bf16.msra.mxu0 0
    %876 = vmatprep.subr.bf16.mxu0 0
    %877 = vmatpush1.bf16.msra.mxu0 0
    %878 = vmatprep.mubr.bf16.mxu0 0
    %879 = vmatmul.mubr.bf16.gmra.mrb[0].mxu0 %v804
    %v880 = vpop.f32.mrb[0].mxu0
    %v881 = vadd.f32 0.0, %v880
    %v882 = vpop.f32.mrb[0].mxu0
    %v883 = vadd.f32 0.0, %v882
    %v884 = vpop.f32.mrb[0].mxu0
    %v885 = vpop.f32.mrb[0].mxu0
    %886 = vdwg.mxu0
    %v887 = vadd.f32 %v800, %v840
    %v888 = vadd.f32 %v801, %v842
    %v889 = vadd.f32 %v802, %v881
    %v890 = vadd.f32 %v803, %v883
    %v891 = vxor.u32 %v887, 2147483648
    %v892 = vmul.f32 %v891, 1.442695
    %v893 = vpow.pop %v892
    %v894 = vadd.f32 %v893, 1.0
    %v895 = vrcp.pop %v894
    %v896 = vmul.f32 1.0, %v895
    %v897 = vxor.u32 %v888, 2147483648
    %v898 = vmul.f32 %v897, 1.442695
    %v899 = vpow.pop %v898
    %v900 = vadd.f32 %v899, 1.0
    %v901 = vrcp.pop %v900
    %v902 = vmul.f32 1.0, %v901
    %v903 = vtanh.pop %v889
    %v904 = vxor.u32 %v890, 2147483648
    %v905 = vmul.f32 %v904, 1.442695
    %v906 = vpow.pop %v905
    %v907 = vadd.f32 %v906, 1.0
    %v908 = vrcp.pop %v907
    %v909 = vmul.f32 1.0, %v908
    %v910 = vmul.f32 %v902, %v794
    %v911 = vmul.f32 %v896, %v903
    %v912 = vadd.f32 %v910, %v911
    %v913 = vtanh.pop %v912
    %v914 = vmul.f32 %v909, %v913
    %s915 = smul.u32 2, 4
    %s916 = smul.addr %s915, 8
    %s917 = scalar_lea.vmem [#allocation2], %s916
    %v918 = vld [vmem:[%s917] sm:$0xff]
    %v919 = vld [vmem:[%s917 + $0x8] sm:$0xff]
    %v920 = vld [vmem:[%s917 + $0x10] sm:$0xff]
    %v921 = vld [vmem:[%s917 + $0x18] sm:$0xff]
    %v922 = vpack.c.bf16 %v914, %v914
    %923 = vmatprep.subr.bf16.mxu0 %v624
    %924 = vmatpush1.bf16.msra.mxu0 %v623
    %925 = vmatprep.subr.bf16.mxu0 %v628
    %926 = vmatpush1.bf16.msra.mxu0 %v627
    %927 = vmatprep.subr.bf16.mxu0 %v632
    %928 = vmatpush1.bf16.msra.mxu0 %v631
    %929 = vmatprep.subr.bf16.mxu0 %v636
    %930 = vmatpush1.bf16.msra.mxu0 %v635
    %931 = vmatprep.subr.bf16.mxu0 %v640
    %932 = vmatpush1.bf16.msra.mxu0 %v639
    %933 = vmatprep.subr.bf16.mxu0 %v644
    %934 = vmatpush1.bf16.msra.mxu0 %v643
    %935 = vmatprep.subr.bf16.mxu0 %v648
    %936 = vmatpush1.bf16.msra.mxu0 %v647
    %937 = vmatprep.subr.bf16.mxu0 %v652
    %938 = vmatpush1.bf16.msra.mxu0 %v651
    %939 = vmatprep.subr.bf16.mxu0 0
    %940 = vmatpush1.bf16.msra.mxu0 0
    %941 = vmatprep.subr.bf16.mxu0 0
    %942 = vmatpush1.bf16.msra.mxu0 0
    %943 = vmatprep.subr.bf16.mxu0 0
    %944 = vmatpush1.bf16.msra.mxu0 0
    %945 = vmatprep.subr.bf16.mxu0 0
    %946 = vmatpush1.bf16.msra.mxu0 0
    %947 = vmatprep.subr.bf16.mxu0 0
    %948 = vmatpush1.bf16.msra.mxu0 0
    %949 = vmatprep.subr.bf16.mxu0 0
    %950 = vmatpush1.bf16.msra.mxu0 0
    %951 = vmatprep.subr.bf16.mxu0 0
    %952 = vmatpush1.bf16.msra.mxu0 0
    %953 = vmatprep.subr.bf16.mxu0 0
    %954 = vmatpush1.bf16.msra.mxu0 0
    %955 = vmatprep.mubr.bf16.mxu0 0
    %956 = vmatmul.mubr.bf16.gmra.mrb[0].mxu0 %v922
    %v957 = vpop.f32.mrb[0].mxu0
    %v958 = vadd.f32 0.0, %v957
    %v959 = vpop.f32.mrb[0].mxu0
    %v960 = vadd.f32 0.0, %v959
    %v961 = vpop.f32.mrb[0].mxu0
    %v962 = vpop.f32.mrb[0].mxu0
    %963 = vdwg.mxu0
    %964 = vmatprep.subr.bf16.mxu0 %v626
    %965 = vmatpush1.bf16.msra.mxu0 %v625
    %966 = vmatprep.subr.bf16.mxu0 %v630
    %967 = vmatpush1.bf16.msra.mxu0 %v629
    %968 = vmatprep.subr.bf16.mxu0 %v634
    %969 = vmatpush1.bf16.msra.mxu0 %v633
    %970 = vmatprep.subr.bf16.mxu0 %v638
    %971 = vmatpush1.bf16.msra.mxu0 %v637
    %972 = vmatprep.subr.bf16.mxu0 %v642
    %973 = vmatpush1.bf16.msra.mxu0 %v641
    %974 = vmatprep.subr.bf16.mxu0 %v646
    %975 = vmatpush1.bf16.msra.mxu0 %v645
    %976 = vmatprep.subr.bf16.mxu0 %v650
    %977 = vmatpush1.bf16.msra.mxu0 %v649
    %978 = vmatprep.subr.bf16.mxu0 %v654
    %979 = vmatpush1.bf16.msra.mxu0 %v653
    %980 = vmatprep.subr.bf16.mxu0 0
    %981 = vmatpush1.bf16.msra.mxu0 0
    %982 = vmatprep.subr.bf16.mxu0 0
    %983 = vmatpush1.bf16.msra.mxu0 0
    %984 = vmatprep.subr.bf16.mxu0 0
    %985 = vmatpush1.bf16.msra.mxu0 0
    %986 = vmatprep.subr.bf16.mxu0 0
    %987 = vmatpush1.bf16.msra.mxu0 0
    %988 = vmatprep.subr.bf16.mxu0 0
    %989 = vmatpush1.bf16.msra.mxu0 0
    %990 = vmatprep.subr.bf16.mxu0 0
    %991 = vmatpush1.bf16.msra.mxu0 0
    %992 = vmatprep.subr.bf16.mxu0 0
    %993 = vmatpush1.bf16.msra.mxu0 0
    %994 = vmatprep.subr.bf16.mxu0 0
    %995 = vmatpush1.bf16.msra.mxu0 0
    %996 = vmatprep.mubr.bf16.mxu0 0
    %997 = vmatmul.mubr.bf16.gmra.mrb[0].mxu0 %v922
    %v998 = vpop.f32.mrb[0].mxu0
    %v999 = vadd.f32 0.0, %v998
    %v1000 = vpop.f32.mrb[0].mxu0
    %v1001 = vadd.f32 0.0, %v1000
    %v1002 = vpop.f32.mrb[0].mxu0
    %v1003 = vpop.f32.mrb[0].mxu0
    %1004 = vdwg.mxu0
    %v1005 = vadd.f32 %v918, %v958
    %v1006 = vadd.f32 %v919, %v960
    %v1007 = vadd.f32 %v920, %v999
    %v1008 = vadd.f32 %v921, %v1001
    %v1009 = vxor.u32 %v1005, 2147483648
    %v1010 = vmul.f32 %v1009, 1.442695
    %v1011 = vpow.pop %v1010
    %v1012 = vadd.f32 %v1011, 1.0
    %v1013 = vrcp.pop %v1012
    %v1014 = vmul.f32 1.0, %v1013
    %v1015 = vxor.u32 %v1006, 2147483648
    %v1016 = vmul.f32 %v1015, 1.442695
    %v1017 = vpow.pop %v1016
    %v1018 = vadd.f32 %v1017, 1.0
    %v1019 = vrcp.pop %v1018
    %v1020 = vmul.f32 1.0, %v1019
    %v1021 = vtanh.pop %v1007
    %v1022 = vxor.u32 %v1008, 2147483648
    %v1023 = vmul.f32 %v1022, 1.442695
    %v1024 = vpow.pop %v1023
    %v1025 = vadd.f32 %v1024, 1.0
    %v1026 = vrcp.pop %v1025
    %v1027 = vmul.f32 1.0, %v1026
    %v1028 = vmul.f32 %v1020, %v912
    %v1029 = vmul.f32 %v1014, %v1021
    %v1030 = vadd.f32 %v1028, %v1029
    %v1031 = vtanh.pop %v1030
    %v1032 = vmul.f32 %v1027, %v1031
    %s1033 = smul.u32 3, 4
    %s1034 = smul.addr %s1033, 8
    %s1035 = scalar_lea.vmem [#allocation2], %s1034
    %v1036 = vld [vmem:[%s1035] sm:$0xff]
    %v1037 = vld [vmem:[%s1035 + $0x8] sm:$0xff]
    %v1038 = vld [vmem:[%s1035 + $0x10] sm:$0xff]
    %v1039 = vld [vmem:[%s1035 + $0x18] sm:$0xff]
    %v1040 = vpack.c.bf16 %v1032, %v1032
    %1041 = vmatprep.subr.bf16.mxu0 %v624
    %1042 = vmatpush1.bf16.msra.mxu0 %v623
    %1043 = vmatprep.subr.bf16.mxu0 %v628
    %1044 = vmatpush1.bf16.msra.mxu0 %v627
    %1045 = vmatprep.subr.bf16.mxu0 %v632
    %1046 = vmatpush1.bf16.msra.mxu0 %v631
    %1047 = vmatprep.subr.bf16.mxu0 %v636
    %1048 = vmatpush1.bf16.msra.mxu0 %v635
    %1049 = vmatprep.subr.bf16.mxu0 %v640
    %1050 = vmatpush1.bf16.msra.mxu0 %v639
    %1051 = vmatprep.subr.bf16.mxu0 %v644
    %1052 = vmatpush1.bf16.msra.mxu0 %v643
    %1053 = vmatprep.subr.bf16.mxu0 %v648
    %1054 = vmatpush1.bf16.msra.mxu0 %v647
    %1055 = vmatprep.subr.bf16.mxu0 %v652
    %1056 = vmatpush1.bf16.msra.mxu0 %v651
    %1057 = vmatprep.subr.bf16.mxu0 0
    %1058 = vmatpush1.bf16.msra.mxu0 0
    %1059 = vmatprep.subr.bf16.mxu0 0
    %1060 = vmatpush1.bf16.msra.mxu0 0
    %1061 = vmatprep.subr.bf16.mxu0 0
    %1062 = vmatpush1.bf16.msra.mxu0 0
    %1063 = vmatprep.subr.bf16.mxu0 0
    %1064 = vmatpush1.bf16.msra.mxu0 0
    %1065 = vmatprep.subr.bf16.mxu0 0
    %1066 = vmatpush1.bf16.msra.mxu0 0
    %1067 = vmatprep.subr.bf16.mxu0 0
    %1068 = vmatpush1.bf16.msra.mxu0 0
    %1069 = vmatprep.subr.bf16.mxu0 0
    %1070 = vmatpush1.bf16.msra.mxu0 0
    %1071 = vmatprep.subr.bf16.mxu0 0
    %1072 = vmatpush1.bf16.msra.mxu0 0
    %1073 = vmatprep.mubr.bf16.mxu0 0
    %1074 = vmatmul.mubr.bf16.gmra.mrb[0].mxu0 %v1040
    %v1075 = vpop.f32.mrb[0].mxu0
    %v1076 = vadd.f32 0.0, %v1075
    %v1077 = vpop.f32.mrb[0].mxu0
    %v1078 = vadd.f32 0.0, %v1077
    %v1079 = vpop.f32.mrb[0].mxu0
    %v1080 = vpop.f32.mrb[0].mxu0
    %1081 = vdwg.mxu0
    %1082 = vmatprep.subr.bf16.mxu0 %v626
    %1083 = vmatpush1.bf16.msra.mxu0 %v625
    %1084 = vmatprep.subr.bf16.mxu0 %v630
    %1085 = vmatpush1.bf16.msra.mxu0 %v629
    %1086 = vmatprep.subr.bf16.mxu0 %v634
    %1087 = vmatpush1.bf16.msra.mxu0 %v633
    %1088 = vmatprep.subr.bf16.mxu0 %v638
    %1089 = vmatpush1.bf16.msra.mxu0 %v637
    %1090 = vmatprep.subr.bf16.mxu0 %v642
    %1091 = vmatpush1.bf16.msra.mxu0 %v641
    %1092 = vmatprep.subr.bf16.mxu0 %v646
    %1093 = vmatpush1.bf16.msra.mxu0 %v645
    %1094 = vmatprep.subr.bf16.mxu0 %v650
    %1095 = vmatpush1.bf16.msra.mxu0 %v649
    %1096 = vmatprep.subr.bf16.mxu0 %v654
    %1097 = vmatpush1.bf16.msra.mxu0 %v653
    %1098 = vmatprep.subr.bf16.mxu0 0
    %1099 = vmatpush1.bf16.msra.mxu0 0
    %1100 = vmatprep.subr.bf16.mxu0 0
    %1101 = vmatpush1.bf16.msra.mxu0 0
    %1102 = vmatprep.subr.bf16.mxu0 0
    %1103 = vmatpush1.bf16.msra.mxu0 0
    %1104 = vmatprep.subr.bf16.mxu0 0
    %1105 = vmatpush1.bf16.msra.mxu0 0
    %1106 = vmatprep.subr.bf16.mxu0 0
    %1107 = vmatpush1.bf16.msra.mxu0 0
    %1108 = vmatprep.subr.bf16.mxu0 0
    %1109 = vmatpush1.bf16.msra.mxu0 0
    %1110 = vmatprep.subr.bf16.mxu0 0
    %1111 = vmatpush1.bf16.msra.mxu0 0
    %1112 = vmatprep.subr.bf16.mxu0 0
    %1113 = vmatpush1.bf16.msra.mxu0 0
    %1114 = vmatprep.mubr.bf16.mxu0 0
    %1115 = vmatmul.mubr.bf16.gmra.mrb[0].mxu0 %v1040
    %v1116 = vpop.f32.mrb[0].mxu0
    %v1117 = vadd.f32 0.0, %v1116
    %v1118 = vpop.f32.mrb[0].mxu0
    %v1119 = vadd.f32 0.0, %v1118
    %v1120 = vpop.f32.mrb[0].mxu0
    %v1121 = vpop.f32.mrb[0].mxu0
    %1122 = vdwg.mxu0
    %v1123 = vadd.f32 %v1036, %v1076
    %v1124 = vadd.f32 %v1037, %v1078
    %v1125 = vadd.f32 %v1038, %v1117
    %v1126 = vadd.f32 %v1039, %v1119
    %v1127 = vxor.u32 %v1123, 2147483648
    %v1128 = vmul.f32 %v1127, 1.442695
    %v1129 = vpow.pop %v1128
    %v1130 = vadd.f32 %v1129, 1.0
    %v1131 = vrcp.pop %v1130
    %v1132 = vmul.f32 1.0, %v1131
    %v1133 = vxor.u32 %v1124, 2147483648
    %v1134 = vmul.f32 %v1133, 1.442695
    %v1135 = vpow.pop %v1134
    %v1136 = vadd.f32 %v1135, 1.0
    %v1137 = vrcp.pop %v1136
    %v1138 = vmul.f32 1.0, %v1137
    %v1139 = vtanh.pop %v1125
    %v1140 = vxor.u32 %v1126, 2147483648
    %v1141 = vmul.f32 %v1140, 1.442695
    %v1142 = vpow.pop %v1141
    %v1143 = vadd.f32 %v1142, 1.0
    %v1144 = vrcp.pop %v1143
    %v1145 = vmul.f32 1.0, %v1144
    %v1146 = vmul.f32 %v1138, %v1030
    %v1147 = vmul.f32 %v1132, %v1139
    %v1148 = vadd.f32 %v1146, %v1147
    %v1149 = vtanh.pop %v1148
    %v1150 = vmul.f32 %v1145, %v1149
    %s1151 = smul.u32 4, 4
    %s1152 = smul.addr %s1151, 8
    %s1153 = scalar_lea.vmem [#allocation2], %s1152
    %v1154 = vld [vmem:[%s1153] sm:$0xff]
    %v1155 = vld [vmem:[%s1153 + $0x8] sm:$0xff]
    %v1156 = vld [vmem:[%s1153 + $0x10] sm:$0xff]
    %v1157 = vld [vmem:[%s1153 + $0x18] sm:$0xff]
    %v1158 = vpack.c.bf16 %v1150, %v1150
    %1159 = vmatprep.subr.bf16.mxu0 %v624
    %1160 = vmatpush1.bf16.msra.mxu0 %v623
    %1161 = vmatprep.subr.bf16.mxu0 %v628
    %1162 = vmatpush1.bf16.msra.mxu0 %v627
    %1163 = vmatprep.subr.bf16.mxu0 %v632
    %1164 = vmatpush1.bf16.msra.mxu0 %v631
    %1165 = vmatprep.subr.bf16.mxu0 %v636
    %1166 = vmatpush1.bf16.msra.mxu0 %v635
    %1167 = vmatprep.subr.bf16.mxu0 %v640
    %1168 = vmatpush1.bf16.msra.mxu0 %v639
    %1169 = vmatprep.subr.bf16.mxu0 %v644
    %1170 = vmatpush1.bf16.msra.mxu0 %v643
    %1171 = vmatprep.subr.bf16.mxu0 %v648
    %1172 = vmatpush1.bf16.msra.mxu0 %v647
    %1173 = vmatprep.subr.bf16.mxu0 %v652
    %1174 = vmatpush1.bf16.msra.mxu0 %v651
    %1175 = vmatprep.subr.bf16.mxu0 0
    %1176 = vmatpush1.bf16.msra.mxu0 0
    %1177 = vmatprep.subr.bf16.mxu0 0
    %1178 = vmatpush1.bf16.msra.mxu0 0
    %1179 = vmatprep.subr.bf16.mxu0 0
    %1180 = vmatpush1.bf16.msra.mxu0 0
    %1181 = vmatprep.subr.bf16.mxu0 0
    %1182 = vmatpush1.bf16.msra.mxu0 0
    %1183 = vmatprep.subr.bf16.mxu0 0
    %1184 = vmatpush1.bf16.msra.mxu0 0
    %1185 = vmatprep.subr.bf16.mxu0 0
    %1186 = vmatpush1.bf16.msra.mxu0 0
    %1187 = vmatprep.subr.bf16.mxu0 0
    %1188 = vmatpush1.bf16.msra.mxu0 0
    %1189 = vmatprep.subr.bf16.mxu0 0
    %1190 = vmatpush1.bf16.msra.mxu0 0
    %1191 = vmatprep.mubr.bf16.mxu0 0
    %1192 = vmatmul.mubr.bf16.gmra.mrb[0].mxu0 %v1158
    %v1193 = vpop.f32.mrb[0].mxu0
    %v1194 = vadd.f32 0.0, %v1193
    %v1195 = vpop.f32.mrb[0].mxu0
    %v1196 = vadd.f32 0.0, %v1195
    %v1197 = vpop.f32.mrb[0].mxu0
    %v1198 = vpop.f32.mrb[0].mxu0
    %1199 = vdwg.mxu0
    %1200 = vmatprep.subr.bf16.mxu0 %v626
    %1201 = vmatpush1.bf16.msra.mxu0 %v625
    %1202 = vmatprep.subr.bf16.mxu0 %v630
    %1203 = vmatpush1.bf16.msra.mxu0 %v629
    %1204 = vmatprep.subr.bf16.mxu0 %v634
    %1205 = vmatpush1.bf16.msra.mxu0 %v633
    %1206 = vmatprep.subr.bf16.mxu0 %v638
    %1207 = vmatpush1.bf16.msra.mxu0 %v637
    %1208 = vmatprep.subr.bf16.mxu0 %v642
    %1209 = vmatpush1.bf16.msra.mxu0 %v641
    %1210 = vmatprep.subr.bf16.mxu0 %v646
    %1211 = vmatpush1.bf16.msra.mxu0 %v645
    %1212 = vmatprep.subr.bf16.mxu0 %v650
    %1213 = vmatpush1.bf16.msra.mxu0 %v649
    %1214 = vmatprep.subr.bf16.mxu0 %v654
    %1215 = vmatpush1.bf16.msra.mxu0 %v653
    %1216 = vmatprep.subr.bf16.mxu0 0
    %1217 = vmatpush1.bf16.msra.mxu0 0
    %1218 = vmatprep.subr.bf16.mxu0 0
    %1219 = vmatpush1.bf16.msra.mxu0 0
    %1220 = vmatprep.subr.bf16.mxu0 0
    %1221 = vmatpush1.bf16.msra.mxu0 0
    %1222 = vmatprep.subr.bf16.mxu0 0
    %1223 = vmatpush1.bf16.msra.mxu0 0
    %1224 = vmatprep.subr.bf16.mxu0 0
    %1225 = vmatpush1.bf16.msra.mxu0 0
    %1226 = vmatprep.subr.bf16.mxu0 0
    %1227 = vmatpush1.bf16.msra.mxu0 0
    %1228 = vmatprep.subr.bf16.mxu0 0
    %1229 = vmatpush1.bf16.msra.mxu0 0
    %1230 = vmatprep.subr.bf16.mxu0 0
    %1231 = vmatpush1.bf16.msra.mxu0 0
    %1232 = vmatprep.mubr.bf16.mxu0 0
    %1233 = vmatmul.mubr.bf16.gmra.mrb[0].mxu0 %v1158
    %v1234 = vpop.f32.mrb[0].mxu0
    %v1235 = vadd.f32 0.0, %v1234
    %v1236 = vpop.f32.mrb[0].mxu0
    %v1237 = vadd.f32 0.0, %v1236
    %v1238 = vpop.f32.mrb[0].mxu0
    %v1239 = vpop.f32.mrb[0].mxu0
    %1240 = vdwg.mxu0
    %v1241 = vadd.f32 %v1154, %v1194
    %v1242 = vadd.f32 %v1155, %v1196
    %v1243 = vadd.f32 %v1156, %v1235
    %v1244 = vadd.f32 %v1157, %v1237
    %v1245 = vxor.u32 %v1241, 2147483648
    %v1246 = vmul.f32 %v1245, 1.442695
    %v1247 = vpow.pop %v1246
    %v1248 = vadd.f32 %v1247, 1.0
    %v1249 = vrcp.pop %v1248
    %v1250 = vmul.f32 1.0, %v1249
    %v1251 = vxor.u32 %v1242, 2147483648
    %v1252 = vmul.f32 %v1251, 1.442695
    %v1253 = vpow.pop %v1252
    %v1254 = vadd.f32 %v1253, 1.0
    %v1255 = vrcp.pop %v1254
    %v1256 = vmul.f32 1.0, %v1255
    %v1257 = vtanh.pop %v1243
    %v1258 = vxor.u32 %v1244, 2147483648
    %v1259 = vmul.f32 %v1258, 1.442695
    %v1260 = vpow.pop %v1259
    %v1261 = vadd.f32 %v1260, 1.0
    %v1262 = vrcp.pop %v1261
    %v1263 = vmul.f32 1.0, %v1262
    %v1264 = vmul.f32 %v1256, %v1148
    %v1265 = vmul.f32 %v1250, %v1257
    %v1266 = vadd.f32 %v1264, %v1265
    %v1267 = vtanh.pop %v1266
    %v1268 = vmul.f32 %v1263, %v1267
    %s1269 = smul.u32 5, 4
    %s1270 = smul.addr %s1269, 8
    %s1271 = scalar_lea.vmem [#allocation2], %s1270
    %v1272 = vld [vmem:[%s1271] sm:$0xff]
    %v1273 = vld [vmem:[%s1271 + $0x8] sm:$0xff]
    %v1274 = vld [vmem:[%s1271 + $0x10] sm:$0xff]
    %v1275 = vld [vmem:[%s1271 + $0x18] sm:$0xff]
    %v1276 = vpack.c.bf16 %v1268, %v1268
    %1277 = vmatprep.subr.bf16.mxu0 %v624
    %1278 = vmatpush1.bf16.msra.mxu0 %v623
    %1279 = vmatprep.subr.bf16.mxu0 %v628
    %1280 = vmatpush1.bf16.msra.mxu0 %v627
    %1281 = vmatprep.subr.bf16.mxu0 %v632
    %1282 = vmatpush1.bf16.msra.mxu0 %v631
    %1283 = vmatprep.subr.bf16.mxu0 %v636
    %1284 = vmatpush1.bf16.msra.mxu0 %v635
    %1285 = vmatprep.subr.bf16.mxu0 %v640
    %1286 = vmatpush1.bf16.msra.mxu0 %v639
    %1287 = vmatprep.subr.bf16.mxu0 %v644
    %1288 = vmatpush1.bf16.msra.mxu0 %v643
    %1289 = vmatprep.subr.bf16.mxu0 %v648
    %1290 = vmatpush1.bf16.msra.mxu0 %v647
    %1291 = vmatprep.subr.bf16.mxu0 %v652
    %1292 = vmatpush1.bf16.msra.mxu0 %v651
    %1293 = vmatprep.subr.bf16.mxu0 0
    %1294 = vmatpush1.bf16.msra.mxu0 0
    %1295 = vmatprep.subr.bf16.mxu0 0
    %1296 = vmatpush1.bf16.msra.mxu0 0
    %1297 = vmatprep.subr.bf16.mxu0 0
    %1298 = vmatpush1.bf16.msra.mxu0 0
    %1299 = vmatprep.subr.bf16.mxu0 0
    %1300 = vmatpush1.bf16.msra.mxu0 0
    %1301 = vmatprep.subr.bf16.mxu0 0
    %1302 = vmatpush1.bf16.msra.mxu0 0
    %1303 = vmatprep.subr.bf16.mxu0 0
    %1304 = vmatpush1.bf16.msra.mxu0 0
    %1305 = vmatprep.subr.bf16.mxu0 0
    %1306 = vmatpush1.bf16.msra.mxu0 0
    %1307 = vmatprep.subr.bf16.mxu0 0
    %1308 = vmatpush1.bf16.msra.mxu0 0
    %1309 = vmatprep.mubr.bf16.mxu0 0
    %1310 = vmatmul.mubr.bf16.gmra.mrb[0].mxu0 %v1276
    %v1311 = vpop.f32.mrb[0].mxu0
    %v1312 = vadd.f32 0.0, %v1311
    %v1313 = vpop.f32.mrb[0].mxu0
    %v1314 = vadd.f32 0.0, %v1313
    %v1315 = vpop.f32.mrb[0].mxu0
    %v1316 = vpop.f32.mrb[0].mxu0
    %1317 = vdwg.mxu0
    %1318 = vmatprep.subr.bf16.mxu0 %v626
    %1319 = vmatpush1.bf16.msra.mxu0 %v625
    %1320 = vmatprep.subr.bf16.mxu0 %v630
    %1321 = vmatpush1.bf16.msra.mxu0 %v629
    %1322 = vmatprep.subr.bf16.mxu0 %v634
    %1323 = vmatpush1.bf16.msra.mxu0 %v633
    %1324 = vmatprep.subr.bf16.mxu0 %v638
    %1325 = vmatpush1.bf16.msra.mxu0 %v637
    %1326 = vmatprep.subr.bf16.mxu0 %v642
    %1327 = vmatpush1.bf16.msra.mxu0 %v641
    %1328 = vmatprep.subr.bf16.mxu0 %v646
    %1329 = vmatpush1.bf16.msra.mxu0 %v645
    %1330 = vmatprep.subr.bf16.mxu0 %v650
    %1331 = vmatpush1.bf16.msra.mxu0 %v649
    %1332 = vmatprep.subr.bf16.mxu0 %v654
    %1333 = vmatpush1.bf16.msra.mxu0 %v653
    %1334 = vmatprep.subr.bf16.mxu0 0
    %1335 = vmatpush1.bf16.msra.mxu0 0
    %1336 = vmatprep.subr.bf16.mxu0 0
    %1337 = vmatpush1.bf16.msra.mxu0 0
    %1338 = vmatprep.subr.bf16.mxu0 0
    %1339 = vmatpush1.bf16.msra.mxu0 0
    %1340 = vmatprep.subr.bf16.mxu0 0
    %1341 = vmatpush1.bf16.msra.mxu0 0
    %1342 = vmatprep.subr.bf16.mxu0 0
    %1343 = vmatpush1.bf16.msra.mxu0 0
    %1344 = vmatprep.subr.bf16.mxu0 0
    %1345 = vmatpush1.bf16.msra.mxu0 0
    %1346 = vmatprep.subr.bf16.mxu0 0
    %1347 = vmatpush1.bf16.msra.mxu0 0
    %1348 = vmatprep.subr.bf16.mxu0 0
    %1349 = vmatpush1.bf16.msra.mxu0 0
    %1350 = vmatprep.mubr.bf16.mxu0 0
    %1351 = vmatmul.mubr.bf16.gmra.mrb[0].mxu0 %v1276
    %v1352 = vpop.f32.mrb[0].mxu0
    %v1353 = vadd.f32 0.0, %v1352
    %v1354 = vpop.f32.mrb[0].mxu0
    %v1355 = vadd.f32 0.0, %v1354
    %v1356 = vpop.f32.mrb[0].mxu0
    %v1357 = vpop.f32.mrb[0].mxu0
    %1358 = vdwg.mxu0
    %v1359 = vadd.f32 %v1272, %v1312
    %v1360 = vadd.f32 %v1273, %v1314
    %v1361 = vadd.f32 %v1274, %v1353
    %v1362 = vadd.f32 %v1275, %v1355
    %v1363 = vxor.u32 %v1359, 2147483648
    %v1364 = vmul.f32 %v1363, 1.442695
    %v1365 = vpow.pop %v1364
    %v1366 = vadd.f32 %v1365, 1.0
    %v1367 = vrcp.pop %v1366
    %v1368 = vmul.f32 1.0, %v1367
    %v1369 = vxor.u32 %v1360, 2147483648
    %v1370 = vmul.f32 %v1369, 1.442695
    %v1371 = vpow.pop %v1370
    %v1372 = vadd.f32 %v1371, 1.0
    %v1373 = vrcp.pop %v1372
    %v1374 = vmul.f32 1.0, %v1373
    %v1375 = vtanh.pop %v1361
    %v1376 = vxor.u32 %v1362, 2147483648
    %v1377 = vmul.f32 %v1376, 1.442695
    %v1378 = vpow.pop %v1377
    %v1379 = vadd.f32 %v1378, 1.0
    %v1380 = vrcp.pop %v1379
    %v1381 = vmul.f32 1.0, %v1380
    %v1382 = vmul.f32 %v1374, %v1266
    %v1383 = vmul.f32 %v1368, %v1375
    %v1384 = vadd.f32 %v1382, %v1383
    %v1385 = vtanh.pop %v1384
    %v1386 = vmul.f32 %v1381, %v1385
    %s1387 = smul.u32 6, 4
    %s1388 = smul.addr %s1387, 8
    %s1389 = scalar_lea.vmem [#allocation2], %s1388
    %v1390 = vld [vmem:[%s1389] sm:$0xff]
    %v1391 = vld [vmem:[%s1389 + $0x8] sm:$0xff]
    %v1392 = vld [vmem:[%s1389 + $0x10] sm:$0xff]
    %v1393 = vld [vmem:[%s1389 + $0x18] sm:$0xff]
    %v1394 = vpack.c.bf16 %v1386, %v1386
    %1395 = vmatprep.subr.bf16.mxu0 %v624
    %1396 = vmatpush1.bf16.msra.mxu0 %v623
    %1397 = vmatprep.subr.bf16.mxu0 %v628
    %1398 = vmatpush1.bf16.msra.mxu0 %v627
    %1399 = vmatprep.subr.bf16.mxu0 %v632
    %1400 = vmatpush1.bf16.msra.mxu0 %v631
    %1401 = vmatprep.subr.bf16.mxu0 %v636
    %1402 = vmatpush1.bf16.msra.mxu0 %v635
    %1403 = vmatprep.subr.bf16.mxu0 %v640
    %1404 = vmatpush1.bf16.msra.mxu0 %v639
    %1405 = vmatprep.subr.bf16.mxu0 %v644
    %1406 = vmatpush1.bf16.msra.mxu0 %v643
    %1407 = vmatprep.subr.bf16.mxu0 %v648
    %1408 = vmatpush1.bf16.msra.mxu0 %v647
    %1409 = vmatprep.subr.bf16.mxu0 %v652
    %1410 = vmatpush1.bf16.msra.mxu0 %v651
    %1411 = vmatprep.subr.bf16.mxu0 0
    %1412 = vmatpush1.bf16.msra.mxu0 0
    %1413 = vmatprep.subr.bf16.mxu0 0
    %1414 = vmatpush1.bf16.msra.mxu0 0
    %1415 = vmatprep.subr.bf16.mxu0 0
    %1416 = vmatpush1.bf16.msra.mxu0 0
    %1417 = vmatprep.subr.bf16.mxu0 0
    %1418 = vmatpush1.bf16.msra.mxu0 0
    %1419 = vmatprep.subr.bf16.mxu0 0
    %1420 = vmatpush1.bf16.msra.mxu0 0
    %1421 = vmatprep.subr.bf16.mxu0 0
    %1422 = vmatpush1.bf16.msra.mxu0 0
    %1423 = vmatprep.subr.bf16.mxu0 0
    %1424 = vmatpush1.bf16.msra.mxu0 0
    %1425 = vmatprep.subr.bf16.mxu0 0
    %1426 = vmatpush1.bf16.msra.mxu0 0
    %1427 = vmatprep.mubr.bf16.mxu0 0
    %1428 = vmatmul.mubr.bf16.gmra.mrb[0].mxu0 %v1394
    %v1429 = vpop.f32.mrb[0].mxu0
    %v1430 = vadd.f32 0.0, %v1429
    %v1431 = vpop.f32.mrb[0].mxu0
    %v1432 = vadd.f32 0.0, %v1431
    %v1433 = vpop.f32.mrb[0].mxu0
    %v1434 = vpop.f32.mrb[0].mxu0
    %1435 = vdwg.mxu0
    %1436 = vmatprep.subr.bf16.mxu0 %v626
    %1437 = vmatpush1.bf16.msra.mxu0 %v625
    %1438 = vmatprep.subr.bf16.mxu0 %v630
    %1439 = vmatpush1.bf16.msra.mxu0 %v629
    %1440 = vmatprep.subr.bf16.mxu0 %v634
    %1441 = vmatpush1.bf16.msra.mxu0 %v633
    %1442 = vmatprep.subr.bf16.mxu0 %v638
    %1443 = vmatpush1.bf16.msra.mxu0 %v637
    %1444 = vmatprep.subr.bf16.mxu0 %v642
    %1445 = vmatpush1.bf16.msra.mxu0 %v641
    %1446 = vmatprep.subr.bf16.mxu0 %v646
    %1447 = vmatpush1.bf16.msra.mxu0 %v645
    %1448 = vmatprep.subr.bf16.mxu0 %v650
    %1449 = vmatpush1.bf16.msra.mxu0 %v649
    %1450 = vmatprep.subr.bf16.mxu0 %v654
    %1451 = vmatpush1.bf16.msra.mxu0 %v653
    %1452 = vmatprep.subr.bf16.mxu0 0
    %1453 = vmatpush1.bf16.msra.mxu0 0
    %1454 = vmatprep.subr.bf16.mxu0 0
    %1455 = vmatpush1.bf16.msra.mxu0 0
    %1456 = vmatprep.subr.bf16.mxu0 0
    %1457 = vmatpush1.bf16.msra.mxu0 0
    %1458 = vmatprep.subr.bf16.mxu0 0
    %1459 = vmatpush1.bf16.msra.mxu0 0
    %1460 = vmatprep.subr.bf16.mxu0 0
    %1461 = vmatpush1.bf16.msra.mxu0 0
    %1462 = vmatprep.subr.bf16.mxu0 0
    %1463 = vmatpush1.bf16.msra.mxu0 0
    %1464 = vmatprep.subr.bf16.mxu0 0
    %1465 = vmatpush1.bf16.msra.mxu0 0
    %1466 = vmatprep.subr.bf16.mxu0 0
    %1467 = vmatpush1.bf16.msra.mxu0 0
    %1468 = vmatprep.mubr.bf16.mxu0 0
    %1469 = vmatmul.mubr.bf16.gmra.mrb[0].mxu0 %v1394
    %v1470 = vpop.f32.mrb[0].mxu0
    %v1471 = vadd.f32 0.0, %v1470
    %v1472 = vpop.f32.mrb[0].mxu0
    %v1473 = vadd.f32 0.0, %v1472
    %v1474 = vpop.f32.mrb[0].mxu0
    %v1475 = vpop.f32.mrb[0].mxu0
    %1476 = vdwg.mxu0
    %v1477 = vadd.f32 %v1390, %v1430
    %v1478 = vadd.f32 %v1391, %v1432
    %v1479 = vadd.f32 %v1392, %v1471
    %v1480 = vadd.f32 %v1393, %v1473
    %v1481 = vxor.u32 %v1477, 2147483648
    %v1482 = vmul.f32 %v1481, 1.442695
    %v1483 = vpow.pop %v1482
    %v1484 = vadd.f32 %v1483, 1.0
    %v1485 = vrcp.pop %v1484
    %v1486 = vmul.f32 1.0, %v1485
    %v1487 = vxor.u32 %v1478, 2147483648
    %v1488 = vmul.f32 %v1487, 1.442695
    %v1489 = vpow.pop %v1488
    %v1490 = vadd.f32 %v1489, 1.0
    %v1491 = vrcp.pop %v1490
    %v1492 = vmul.f32 1.0, %v1491
    %v1493 = vtanh.pop %v1479
    %v1494 = vxor.u32 %v1480, 2147483648
    %v1495 = vmul.f32 %v1494, 1.442695
    %v1496 = vpow.pop %v1495
    %v1497 = vadd.f32 %v1496, 1.0
    %v1498 = vrcp.pop %v1497
    %v1499 = vmul.f32 1.0, %v1498
    %v1500 = vmul.f32 %v1492, %v1384
    %v1501 = vmul.f32 %v1486, %v1493
    %v1502 = vadd.f32 %v1500, %v1501
    %v1503 = vtanh.pop %v1502
    %v1504 = vmul.f32 %v1499, %v1503
    %s1505 = smul.u32 7, 4
    %s1506 = smul.addr %s1505, 8
    %s1507 = scalar_lea.vmem [#allocation2], %s1506
    %v1508 = vld [vmem:[%s1507] sm:$0xff]
    %v1509 = vld [vmem:[%s1507 + $0x8] sm:$0xff]
    %v1510 = vld [vmem:[%s1507 + $0x10] sm:$0xff]
    %v1511 = vld [vmem:[%s1507 + $0x18] sm:$0xff]
    %v1512 = vpack.c.bf16 %v1504, %v1504
    %1513 = vmatprep.subr.bf16.mxu0 %v624
    %1514 = vmatpush1.bf16.msra.mxu0 %v623
    %1515 = vmatprep.subr.bf16.mxu0 %v628
    %1516 = vmatpush1.bf16.msra.mxu0 %v627
    %1517 = vmatprep.subr.bf16.mxu0 %v632
    %1518 = vmatpush1.bf16.msra.mxu0 %v631
    %1519 = vmatprep.subr.bf16.mxu0 %v636
    %1520 = vmatpush1.bf16.msra.mxu0 %v635
    %1521 = vmatprep.subr.bf16.mxu0 %v640
    %1522 = vmatpush1.bf16.msra.mxu0 %v639
    %1523 = vmatprep.subr.bf16.mxu0 %v644
    %1524 = vmatpush1.bf16.msra.mxu0 %v643
    %1525 = vmatprep.subr.bf16.mxu0 %v648
    %1526 = vmatpush1.bf16.msra.mxu0 %v647
    %1527 = vmatprep.subr.bf16.mxu0 %v652
    %1528 = vmatpush1.bf16.msra.mxu0 %v651
    %1529 = vmatprep.subr.bf16.mxu0 0
    %1530 = vmatpush1.bf16.msra.mxu0 0
    %1531 = vmatprep.subr.bf16.mxu0 0
    %1532 = vmatpush1.bf16.msra.mxu0 0
    %1533 = vmatprep.subr.bf16.mxu0 0
    %1534 = vmatpush1.bf16.msra.mxu0 0
    %1535 = vmatprep.subr.bf16.mxu0 0
    %1536 = vmatpush1.bf16.msra.mxu0 0
    %1537 = vmatprep.subr.bf16.mxu0 0
    %1538 = vmatpush1.bf16.msra.mxu0 0
    %1539 = vmatprep.subr.bf16.mxu0 0
    %1540 = vmatpush1.bf16.msra.mxu0 0
    %1541 = vmatprep.subr.bf16.mxu0 0
    %1542 = vmatpush1.bf16.msra.mxu0 0
    %1543 = vmatprep.subr.bf16.mxu0 0
    %1544 = vmatpush1.bf16.msra.mxu0 0
    %1545 = vmatprep.mubr.bf16.mxu0 0
    %1546 = vmatmul.mubr.bf16.gmra.mrb[0].mxu0 %v1512
    %v1547 = vpop.f32.mrb[0].mxu0
    %v1548 = vadd.f32 0.0, %v1547
    %v1549 = vpop.f32.mrb[0].mxu0
    %v1550 = vadd.f32 0.0, %v1549
    %v1551 = vpop.f32.mrb[0].mxu0
    %v1552 = vpop.f32.mrb[0].mxu0
    %1553 = vdwg.mxu0
    %1554 = vmatprep.subr.bf16.mxu0 %v626
    %1555 = vmatpush1.bf16.msra.mxu0 %v625
    %1556 = vmatprep.subr.bf16.mxu0 %v630
    %1557 = vmatpush1.bf16.msra.mxu0 %v629
    %1558 = vmatprep.subr.bf16.mxu0 %v634
    %1559 = vmatpush1.bf16.msra.mxu0 %v633
    %1560 = vmatprep.subr.bf16.mxu0 %v638
    %1561 = vmatpush1.bf16.msra.mxu0 %v637
    %1562 = vmatprep.subr.bf16.mxu0 %v642
    %1563 = vmatpush1.bf16.msra.mxu0 %v641
    %1564 = vmatprep.subr.bf16.mxu0 %v646
    %1565 = vmatpush1.bf16.msra.mxu0 %v645
    %1566 = vmatprep.subr.bf16.mxu0 %v650
    %1567 = vmatpush1.bf16.msra.mxu0 %v649
    %1568 = vmatprep.subr.bf16.mxu0 %v654
    %1569 = vmatpush1.bf16.msra.mxu0 %v653
    %1570 = vmatprep.subr.bf16.mxu0 0
    %1571 = vmatpush1.bf16.msra.mxu0 0
    %1572 = vmatprep.subr.bf16.mxu0 0
    %1573 = vmatpush1.bf16.msra.mxu0 0
    %1574 = vmatprep.subr.bf16.mxu0 0
    %1575 = vmatpush1.bf16.msra.mxu0 0
    %1576 = vmatprep.subr.bf16.mxu0 0
    %1577 = vmatpush1.bf16.msra.mxu0 0
    %1578 = vmatprep.subr.bf16.mxu0 0
    %1579 = vmatpush1.bf16.msra.mxu0 0
    %1580 = vmatprep.subr.bf16.mxu0 0
    %1581 = vmatpush1.bf16.msra.mxu0 0
    %1582 = vmatprep.subr.bf16.mxu0 0
    %1583 = vmatpush1.bf16.msra.mxu0 0
    %1584 = vmatprep.subr.bf16.mxu0 0
    %1585 = vmatpush1.bf16.msra.mxu0 0
    %1586 = vmatprep.mubr.bf16.mxu0 0
    %1587 = vmatmul.mubr.bf16.gmra.mrb[0].mxu0 %v1512
    %v1588 = vpop.f32.mrb[0].mxu0
    %v1589 = vadd.f32 0.0, %v1588
    %v1590 = vpop.f32.mrb[0].mxu0
    %v1591 = vadd.f32 0.0, %v1590
    %v1592 = vpop.f32.mrb[0].mxu0
    %v1593 = vpop.f32.mrb[0].mxu0
    %1594 = vdwg.mxu0
    %v1595 = vadd.f32 %v1508, %v1548
    %v1596 = vadd.f32 %v1509, %v1550
    %v1597 = vadd.f32 %v1510, %v1589
    %v1598 = vadd.f32 %v1511, %v1591
    %v1599 = vxor.u32 %v1595, 2147483648
    %v1600 = vmul.f32 %v1599, 1.442695
    %v1601 = vpow.pop %v1600
    %v1602 = vadd.f32 %v1601, 1.0
    %v1603 = vrcp.pop %v1602
    %v1604 = vmul.f32 1.0, %v1603
    %v1605 = vxor.u32 %v1596, 2147483648
    %v1606 = vmul.f32 %v1605, 1.442695
    %v1607 = vpow.pop %v1606
    %v1608 = vadd.f32 %v1607, 1.0
    %v1609 = vrcp.pop %v1608
    %v1610 = vmul.f32 1.0, %v1609
    %v1611 = vtanh.pop %v1597
    %v1612 = vxor.u32 %v1598, 2147483648
    %v1613 = vmul.f32 %v1612, 1.442695
    %v1614 = vpow.pop %v1613
    %v1615 = vadd.f32 %v1614, 1.0
    %v1616 = vrcp.pop %v1615
    %v1617 = vmul.f32 1.0, %v1616
    %v1618 = vmul.f32 %v1610, %v1502
    %v1619 = vmul.f32 %v1604, %v1611
    %v1620 = vadd.f32 %v1618, %v1619
    %v1621 = vtanh.pop %v1620
    %v1622 = vmul.f32 %v1617, %v1621
    %1623 = vst [vmem:[#allocation3] sm:$0xff] %v1622
    %1624 = vst [vmem:[#allocation4] sm:$0xff] %v1620
    // Predicated region
    $region42: #{tpu_custom_call.1} parent=1 // pred_check
      %p1625 = pneg %p77
    $region43: #{tpu_custom_call.1} parent=1 // pred_check_branch
      %1627 = sbr.rel (%p1625) target = $region45
    $region44: #{tpu_custom_call.1} parent=1 // pred_region
      %v1628 = vpack.c.bf16 %v1622, %v1622
      %v1629 = vld [vmem:[#allocation11] sm:$0xf]
      %v1630 = vld [vmem:[#allocation11 + $0x4] sm:$0xf]
      %v1631 = vld [vmem:[#allocation11 + $0x8] sm:$0xf]
      %v1632 = vld [vmem:[#allocation11 + $0xc] sm:$0xf]
      %v1633 = vld [vmem:[#allocation11 + $0x10] sm:$0xf]
      %v1634 = vld [vmem:[#allocation11 + $0x14] sm:$0xf]
      %v1635 = vld [vmem:[#allocation11 + $0x18] sm:$0xf]
      %v1636 = vld [vmem:[#allocation11 + $0x1c] sm:$0xf]
      %v1637 = vld [vmem:[#allocation11 + $0x20] sm:$0xf]
      %v1638 = vld [vmem:[#allocation11 + $0x24] sm:$0xf]
      %v1639 = vld [vmem:[#allocation11 + $0x28] sm:$0xf]
      %v1640 = vld [vmem:[#allocation11 + $0x2c] sm:$0xf]
      %v1641 = vld [vmem:[#allocation11 + $0x30] sm:$0xf]
      %v1642 = vld [vmem:[#allocation11 + $0x34] sm:$0xf]
      %v1643 = vld [vmem:[#allocation11 + $0x38] sm:$0xf]
      %v1644 = vld [vmem:[#allocation11 + $0x3c] sm:$0xf]
      %v1645 = vld [vmem:[%s4] sm:$0x1]
      %v1647 = vlaneseq
      %v1648 = vshrl.u32 %v1647, 7
      %v1649 = vsub.s32 0, %v1648
      %v1650 = vrot.slane %v1645, %v1649
      %v1668 = vunpack.c.l.b16 %v1629
      %v1669 = vunpack.c.l.b16 %v1630
      %v1670 = vunpack.c.l.b16 %v1631
      %v1671 = vunpack.c.l.b16 %v1632
      %v1672 = vunpack.c.l.b16 %v1633
      %v1673 = vunpack.c.l.b16 %v1634
      %v1674 = vunpack.c.l.b16 %v1635
      %v1675 = vunpack.c.l.b16 %v1636
      %v1676 = vunpack.c.l.b16 %v1637
      %v1677 = vunpack.c.l.b16 %v1638
      %v1678 = vunpack.c.l.b16 %v1639
      %v1679 = vunpack.c.l.b16 %v1640
      %v1680 = vunpack.c.l.b16 %v1641
      %v1681 = vunpack.c.l.b16 %v1642
      %v1682 = vunpack.c.l.b16 %v1643
      %v1683 = vunpack.c.l.b16 %v1644
      %v1684 = vpack.c.b16 %v1669, %v1668
      %v1685 = vpack.c.b16 %v1671, %v1670
      %v1686 = vpack.c.b16 %v1673, %v1672
      %v1687 = vpack.c.b16 %v1675, %v1674
      %v1688 = vpack.c.b16 %v1677, %v1676
      %v1689 = vpack.c.b16 %v1679, %v1678
      %v1690 = vpack.c.b16 %v1681, %v1680
      %v1691 = vpack.c.b16 %v1683, %v1682
      %1700 = vmatprep.subr.bf16.mxu0 0
      %1701 = vmatpush1.bf16.msra.mxu0 %v1684
      %1702 = vmatprep.subr.bf16.mxu0 0
      %1703 = vmatpush1.bf16.msra.mxu0 %v1685
      %1704 = vmatprep.subr.bf16.mxu0 0
      %1705 = vmatpush1.bf16.msra.mxu0 %v1686
      %1706 = vmatprep.subr.bf16.mxu0 0
      %1707 = vmatpush1.bf16.msra.mxu0 %v1687
      %1708 = vmatprep.subr.bf16.mxu0 0
      %1709 = vmatpush1.bf16.msra.mxu0 %v1688
      %1710 = vmatprep.subr.bf16.mxu0 0
      %1711 = vmatpush1.bf16.msra.mxu0 %v1689
      %1712 = vmatprep.subr.bf16.mxu0 0
      %1713 = vmatpush1.bf16.msra.mxu0 %v1690
      %1714 = vmatprep.subr.bf16.mxu0 0
      %1715 = vmatpush1.bf16.msra.mxu0 %v1691
      %1716 = vmatprep.subr.bf16.mxu0 0
      %1717 = vmatpush1.bf16.msra.mxu0 0
      %1718 = vmatprep.subr.bf16.mxu0 0
      %1719 = vmatpush1.bf16.msra.mxu0 0
      %1720 = vmatprep.subr.bf16.mxu0 0
      %1721 = vmatpush1.bf16.msra.mxu0 0
      %1722 = vmatprep.subr.bf16.mxu0 0
      %1723 = vmatpush1.bf16.msra.mxu0 0
      %1724 = vmatprep.subr.bf16.mxu0 0
      %1725 = vmatpush1.bf16.msra.mxu0 0
      %1726 = vmatprep.subr.bf16.mxu0 0
      %1727 = vmatpush1.bf16.msra.mxu0 0
      %1728 = vmatprep.subr.bf16.mxu0 0
      %1729 = vmatpush1.bf16.msra.mxu0 0
      %1730 = vmatprep.subr.bf16.mxu0 0
      %1731 = vmatpush1.bf16.msra.mxu0 0
      %1732 = vmatprep.mubr.bf16.mxu0 0
      %1733 = vmatmul.mubr.bf16.gmra.mrb[0].mxu0 %v1628
      %v1734 = vpop.f32.mrb[0].mxu0
      %v1735 = vadd.f32 %v1650, %v1734
      %v1736 = vpop.f32.mrb[0].mxu0
      %v1737 = vpop.f32.mrb[0].mxu0
      %v1738 = vpop.f32.mrb[0].mxu0
      %1739 = vdwg.mxu0
      %v1740 = vlaneseq
      %v1741 = vand.u32 %v1740, 127
      %vm1742 = vcmp.lt.s32.totalorder %v1741, 4
      %v1743 = vsel %vm1742, %v1735, -1e+30
      %1744 = vmax.xlane.f32.xlu0 %v1743
      %v1745 = vpop.xlane.xlu0 %1744
      %v1746 = vsub.f32 %v1743, %v1745
      %v1747 = vmul.f32 %v1746, 1.442695
      %v1748 = vpow.pop %v1747
      %1749 = vadd.xlane.f32.xlu0 %v1748
      %v1750 = vpop.xlane.xlu0 %1749
      %v1751 = vrcp.pop %v1750
      %v1752 = vmul.f32 %v1748, %v1751
      %1753 = vst [vmem:[#allocation13] sm:$0xff] %v1752
    $region45: #{tpu_custom_call.1} parent=1 // pred_fallthru
      _
    // Predicated region
    $region46: #{tpu_custom_call.1} parent=1 // pred_check
      _
    $region47: #{tpu_custom_call.1} parent=1 // pred_check_branch
      %1755 = sbr.rel (0) target = $region49
    $region48: #{tpu_custom_call.1} parent=1 // pred_region
      %s1757 = ssub.s32 128, 128
      %1758 = vsyncadd [#allocation7], %s1757
      %s1760 = sshll.u32 [#allocation13], 4
      %s1761 = int_to_ptr.vmem [resolvable:$true] %s1760
      %1763 = dma.vmem_to_hbm [thread:$0]  %s1761, 128, %s5, [#allocation7]
    $region49: #{tpu_custom_call.1} parent=1 // pred_fallthru
      _
    // Predicated region
    $region50: #{tpu_custom_call.1} parent=1 // pred_check
      _
    $region51: #{tpu_custom_call.1} parent=1 // pred_check_branch
      %1765 = sbr.rel (0) target = $region53
    $region52: #{tpu_custom_call.1} parent=1 // pred_region
      %1766 = dma.done [#allocation7], 128
    $region53: #{tpu_custom_call.1} parent=1 // pred_fallthru
      _
    %1767 = vsyncpa [#allocation6], 1
    %1768 = vsyncpa [#allocation9], 1
    %1769 = vsyncpa [#allocation12], 1
    %1770 = vsyncpa [#allocation7], 1

</llo_original>
